<compile_context>
chip_gen: v5e
topology: v5e:2x2
jax: 0.10.0
libtpu: 0.0.40
codegen_flags: <defaults>
</compile_context>

<pallas_src>
import jax
import jax.numpy as jnp
from jax.experimental import pallas as pl
from jax.experimental.pallas import tpu as pltpu

NUM_CLASSES = 10
HIDDEN = 512
K_IN = 28 * 28     # 784 (torch: x.view(-1, 784)); equals the full last dim -> legal block dim
OUT_PAD = 128      # lane-dense padded class dimension
MAX_TB = 512       # batch-tile cap


def _round_up(n, m):
    return ((n + m - 1) // m) * m


def mlp_kernel(x_ref, w1_ref, b1_ref, w2_ref, b2_ref, w3_ref, b3_ref, o_ref):
    # Fused 3-layer MLP on one (TB, 784) batch tile.
    # bf16 operands on the MXU, f32 accumulation + f32 epilogue.
    x = x_ref[...]                                                              # (TB, 784) bf16
    h1 = jnp.dot(x, w1_ref[...], preferred_element_type=jnp.float32) + b1_ref[...]
    h1 = jnp.maximum(h1, 0.0).astype(jnp.bfloat16)
    h2 = jnp.dot(h1, w2_ref[...], preferred_element_type=jnp.float32) + b2_ref[...]
    h2 = jnp.maximum(h2, 0.0).astype(jnp.bfloat16)
    # b3 already carries -1e30 in the padded class lanes (mask baked in host-side),
    # so exp() zeroes them and the softmax covers only the real 10 classes.
    logits = jnp.dot(h2, w3_ref[...], preferred_element_type=jnp.float32) + b3_ref[...]

    # Numerically-stable softmax over the class axis (torch dim=1).
    m = jnp.max(logits, axis=-1, keepdims=True)
    e = jnp.exp(logits - m)
    denom = jnp.sum(e, axis=-1, keepdims=True)
    # Exact divide (not approx reciprocal): rows must sum to 1 to f32 precision.
    o_ref[...] = e / denom


def prepare_params(params):
    """One-time host-side prep: bf16 weights, lane-padding for W3, mask baked into b3."""
    w1, b1, w2, b2, w3, b3 = params
    w3p = jnp.zeros((HIDDEN, OUT_PAD), jnp.bfloat16).at[:, :NUM_CLASSES].set(
        w3.astype(jnp.bfloat16))
    b3p = jnp.full((1, OUT_PAD), -1e30, jnp.float32).at[:, :NUM_CLASSES].set(
        b3.reshape(1, NUM_CLASSES).astype(jnp.float32))
    return (w1.astype(jnp.bfloat16), b1.reshape(1, HIDDEN).astype(jnp.float32),
            w2.astype(jnp.bfloat16), b2.reshape(1, HIDDEN).astype(jnp.float32),
            w3p, b3p)


def mnist_net_forward(x_nchw, prepared):
    w1, b1, w2, b2, w3p, b3p = prepared
    B = x_nchw.shape[0]

    # Batch tile: >=16 rows when possible (bf16 sublane packing), capped at 512.
    if B <= 16:
        tb = _round_up(B, 8)
    else:
        tb = min(MAX_TB, _round_up(B, 16))
    bp = _round_up(B, tb)
    nb = bp // tb

    # torch: x.view(-1, 784); single cast pass to bf16, no K padding or re-materialization.
    x = x_nchw.reshape(B, K_IN).astype(jnp.bfloat16)
    if bp != B:
        x = jnp.pad(x, ((0, bp - B), (0, 0)))

    # Weights/biases use a constant index_map -> fetched once, VMEM-resident.
    resident = lambda shape: pl.BlockSpec(shape, lambda i: (0, 0))

    out = pl.pallas_call(
        mlp_kernel,
        out_shape=jax.ShapeDtypeStruct((bp, OUT_PAD), jnp.float32),
        grid_spec=pltpu.PrefetchScalarGridSpec(
            num_scalar_prefetch=0,
            grid=(nb,),
            in_specs=[
                pl.BlockSpec((tb, K_IN), lambda i: (i, 0)),   # x tile, pipelined over batch
                resident(w1.shape), resident(b1.shape),
                resident(w2.shape), resident(b2.shape),
                resident(w3p.shape), resident(b3p.shape),
            ],
            out_specs=pl.BlockSpec((tb, OUT_PAD), lambda i: (i, 0)),
        ),
        compiler_params=pltpu.CompilerParams(
            dimension_semantics=("parallel",)),  # batch tiles are independent
    )(x, w1, b1, w2, b2, w3p, b3p)

    return out[:B, :NUM_CLASSES]


def init_params(key):
    # Deterministic synthetic parameters mirroring nn.Linear shapes
    # (fc1: (512,784), fc2: (512,512), fc3: (10,512)) stored transposed as (in, out).
    ks = jax.random.split(key, 6)

    def linear(kw, kb, fan_in, fan_out):
        bound = 1.0 / jnp.sqrt(fan_in)
        w = jax.random.uniform(kw, (fan_in, fan_out), jnp.float32, -bound, bound)
        b = jax.random.uniform(kb, (1, fan_out), jnp.float32, -bound, bound)
        return w, b

    w1, b1 = linear(ks[0], ks[1], K_IN, HIDDEN)
    w2, b2 = linear(ks[2], ks[3], HIDDEN, HIDDEN)
    w3, b3 = linear(ks[4], ks[5], HIDDEN, NUM_CLASSES)
    return (w1, b1, w2, b2, w3, b3)


if __name__ == "__main__":
    key = jax.random.PRNGKey(0)
    k_x, k_p = jax.random.split(key)
    params = init_params(k_p)
    prepared = prepare_params(params)

    # Small batch of MNIST-shaped inputs, NCHW like the torch module expects.
    B = 8
    x = jax.random.normal(k_x, (B, 1, 28, 28), jnp.float32)

    fwd = jax.jit(mnist_net_forward)
    out = jax.block_until_ready(fwd(x, prepared))

    # Reference in plain f32 JAX (same math as the torch module).
    w1, b1, w2, b2, w3, b3 = params
    xf = x.reshape(B, K_IN)
    h1 = jnp.maximum(xf @ w1 + b1, 0.0)
    h2 = jnp.maximum(h1 @ w2 + b2, 0.0)
    ref = jax.nn.softmax(h2 @ w3 + b3, axis=1)

    assert out.shape == (B, NUM_CLASSES)
    # bf16 matmuls -> tolerance loosened vs. the f32 reference.
    assert jnp.allclose(out, ref, atol=5e-2, rtol=5e-2), float(jnp.max(jnp.abs(out - ref)))
    # Exact softmax divide: rows sum to 1 to f32 precision.
    assert jnp.allclose(jnp.sum(out, axis=1), 1.0, atol=1e-3)

    print("KERNEL_OK")
</pallas_src>

<mosaic_0001>
module attributes {stable_mosaic.version = 11 : i64} {
  func.func @mlp_kernel(%arg0: i32, %arg1: memref<8x784xbf16, #tpu.memory_space<vmem>>, %arg2: memref<784x512xbf16, #tpu.memory_space<vmem>>, %arg3: memref<1x512xf32, #tpu.memory_space<vmem>>, %arg4: memref<512x512xbf16, #tpu.memory_space<vmem>>, %arg5: memref<1x512xf32, #tpu.memory_space<vmem>>, %arg6: memref<512x128xbf16, #tpu.memory_space<vmem>>, %arg7: memref<1x128xf32, #tpu.memory_space<vmem>>, %arg8: memref<8x128xf32, #tpu.memory_space<vmem>>) attributes {dimension_semantics = [#tpu.dimension_semantics<parallel>], iteration_bounds = array<i64: 1>, scalar_prefetch = 0 : i64, scratch_operands = 0 : i64, tpu.core_type = #tpu.core_type<tc>, window_params = [{transform_indices = @transform_0, window_bounds = array<i64: 8, 784>}, {pipeline_mode = #tpu.pipeline_mode<synchronous>, transform_indices = @transform_1, window_bounds = array<i64: 784, 512>}, {pipeline_mode = #tpu.pipeline_mode<synchronous>, transform_indices = @transform_2, window_bounds = array<i64: 1, 512>}, {pipeline_mode = #tpu.pipeline_mode<synchronous>, transform_indices = @transform_3, window_bounds = array<i64: 512, 512>}, {pipeline_mode = #tpu.pipeline_mode<synchronous>, transform_indices = @transform_4, window_bounds = array<i64: 1, 512>}, {pipeline_mode = #tpu.pipeline_mode<synchronous>, transform_indices = @transform_5, window_bounds = array<i64: 512, 128>}, {pipeline_mode = #tpu.pipeline_mode<synchronous>, transform_indices = @transform_6, window_bounds = array<i64: 1, 128>}, {transform_indices = @transform_7, window_bounds = array<i64: 8, 128>}]} {
    %c0 = arith.constant 0 : index
    %c0_0 = arith.constant 0 : index
    %0 = vector.load %arg1[%c0, %c0_0] : memref<8x784xbf16, #tpu.memory_space<vmem>>, vector<8x784xbf16>
    %c0_1 = arith.constant 0 : index
    %c0_2 = arith.constant 0 : index
    %1 = vector.load %arg2[%c0_1, %c0_2] : memref<784x512xbf16, #tpu.memory_space<vmem>>, vector<784x512xbf16>
    %cst = arith.constant dense<0.000000e+00> : vector<8x512xf32>
    %2 = tpu.matmul %0, %1, %cst {dimension_numbers = #tpu.dot_dimension_numbers<[1], [0], [0], [1], [0, 0, 1, 1], [], []>} : vector<8x784xbf16>, vector<784x512xbf16>, vector<8x512xf32> -> vector<8x512xf32>
    %c0_3 = arith.constant 0 : index
    %c0_4 = arith.constant 0 : index
    %3 = vector.load %arg3[%c0_3, %c0_4] : memref<1x512xf32, #tpu.memory_space<vmem>>, vector<1x512xf32>
    %4 = vector.broadcast %3 : vector<1x512xf32> to vector<8x512xf32>
    %5 = arith.addf %2, %4 : vector<8x512xf32>
    %cst_5 = arith.constant 0.000000e+00 : f32
    %6 = vector.broadcast %cst_5 : f32 to vector<8x512xf32>
    %7 = arith.maximumf %5, %6 : vector<8x512xf32>
    %8 = arith.truncf %7 : vector<8x512xf32> to vector<8x512xbf16>
    %c0_6 = arith.constant 0 : index
    %c0_7 = arith.constant 0 : index
    %9 = vector.load %arg4[%c0_6, %c0_7] : memref<512x512xbf16, #tpu.memory_space<vmem>>, vector<512x512xbf16>
    %cst_8 = arith.constant dense<0.000000e+00> : vector<8x512xf32>
    %10 = tpu.matmul %8, %9, %cst_8 {dimension_numbers = #tpu.dot_dimension_numbers<[1], [0], [0], [1], [0, 0, 1, 1], [], []>} : vector<8x512xbf16>, vector<512x512xbf16>, vector<8x512xf32> -> vector<8x512xf32>
    %c0_9 = arith.constant 0 : index
    %c0_10 = arith.constant 0 : index
    %11 = vector.load %arg5[%c0_9, %c0_10] : memref<1x512xf32, #tpu.memory_space<vmem>>, vector<1x512xf32>
    %12 = vector.broadcast %11 : vector<1x512xf32> to vector<8x512xf32>
    %13 = arith.addf %10, %12 : vector<8x512xf32>
    %cst_11 = arith.constant 0.000000e+00 : f32
    %14 = vector.broadcast %cst_11 : f32 to vector<8x512xf32>
    %15 = arith.maximumf %13, %14 : vector<8x512xf32>
    %16 = arith.truncf %15 : vector<8x512xf32> to vector<8x512xbf16>
    %c0_12 = arith.constant 0 : index
    %c0_13 = arith.constant 0 : index
    %17 = vector.load %arg6[%c0_12, %c0_13] : memref<512x128xbf16, #tpu.memory_space<vmem>>, vector<512x128xbf16>
    %cst_14 = arith.constant dense<0.000000e+00> : vector<8x128xf32>
    %18 = tpu.matmul %16, %17, %cst_14 {dimension_numbers = #tpu.dot_dimension_numbers<[1], [0], [0], [1], [0, 0, 1, 1], [], []>} : vector<8x512xbf16>, vector<512x128xbf16>, vector<8x128xf32> -> vector<8x128xf32>
    %c0_15 = arith.constant 0 : index
    %c0_16 = arith.constant 0 : index
    %19 = vector.load %arg7[%c0_15, %c0_16] : memref<1x128xf32, #tpu.memory_space<vmem>>, vector<1x128xf32>
    %20 = vector.broadcast %19 : vector<1x128xf32> to vector<8x128xf32>
    %21 = arith.addf %18, %20 : vector<8x128xf32>
    %cst_17 = arith.constant dense<0xFF800000> : vector<8xf32>
    %22 = vector.multi_reduction <maximumf>, %21, %cst_17 [1] : vector<8x128xf32> to vector<8xf32>
    %23 = vector.shape_cast %22 : vector<8xf32> to vector<8x1xf32>
    %24 = vector.broadcast %23 : vector<8x1xf32> to vector<8x128xf32>
    %25 = arith.subf %21, %24 : vector<8x128xf32>
    %26 = math.exp %25 : vector<8x128xf32>
    %cst_18 = arith.constant dense<0.000000e+00> : vector<8xf32>
    %27 = vector.multi_reduction <add>, %26, %cst_18 [1] : vector<8x128xf32> to vector<8xf32>
    %28 = vector.shape_cast %27 : vector<8xf32> to vector<8x1xf32>
    %29 = vector.broadcast %28 : vector<8x1xf32> to vector<8x128xf32>
    %30 = arith.divf %26, %29 : vector<8x128xf32>
    %c0_19 = arith.constant 0 : index
    %c0_20 = arith.constant 0 : index
    %31 = vector.load %arg8[%c0_19, %c0_20] : memref<8x128xf32, #tpu.memory_space<vmem>>, vector<8x128xf32>
    tpu.vector_store %arg8[%c0_19, %c0_20], %30 {strides = array<i32>} : memref<8x128xf32, #tpu.memory_space<vmem>>, vector<8x128xf32>,
    return
  }
  func.func @transform_0(%arg0: i32) -> (i32, i32) {
    %c0_i32 = arith.constant 0 : i32
    %c0_i32_0 = arith.constant 0 : i32
    return %arg0, %c0_i32 : i32, i32
  }
  func.func @transform_1(%arg0: i32) -> (i32, i32) {
    %c0_i32 = arith.constant 0 : i32
    %c0_i32_0 = arith.constant 0 : i32
    %c0_i32_1 = arith.constant 0 : i32
    return %c0_i32, %c0_i32_0 : i32, i32
  }
  func.func @transform_2(%arg0: i32) -> (i32, i32) {
    %c0_i32 = arith.constant 0 : i32
    %c0_i32_0 = arith.constant 0 : i32
    %c0_i32_1 = arith.constant 0 : i32
    return %c0_i32, %c0_i32_0 : i32, i32
  }
  func.func @transform_3(%arg0: i32) -> (i32, i32) {
    %c0_i32 = arith.constant 0 : i32
    %c0_i32_0 = arith.constant 0 : i32
    %c0_i32_1 = arith.constant 0 : i32
    return %c0_i32, %c0_i32_0 : i32, i32
  }
  func.func @transform_4(%arg0: i32) -> (i32, i32) {
    %c0_i32 = arith.constant 0 : i32
    %c0_i32_0 = arith.constant 0 : i32
    %c0_i32_1 = arith.constant 0 : i32
    return %c0_i32, %c0_i32_0 : i32, i32
  }
  func.func @transform_5(%arg0: i32) -> (i32, i32) {
    %c0_i32 = arith.constant 0 : i32
    %c0_i32_0 = arith.constant 0 : i32
    %c0_i32_1 = arith.constant 0 : i32
    return %c0_i32, %c0_i32_0 : i32, i32
  }
  func.func @transform_6(%arg0: i32) -> (i32, i32) {
    %c0_i32 = arith.constant 0 : i32
    %c0_i32_0 = arith.constant 0 : i32
    %c0_i32_1 = arith.constant 0 : i32
    return %c0_i32, %c0_i32_0 : i32, i32
  }
  func.func @transform_7(%arg0: i32) -> (i32, i32) {
    %c0_i32 = arith.constant 0 : i32
    %c0_i32_0 = arith.constant 0 : i32
    return %arg0, %c0_i32 : i32, i32
  }
}

</mosaic_0001>

<llo_original>
// kernel: mnist_net_forward.1
$region0: #{mnist_net_forward.1}
  #allocation0 [shape = 'u32[]', space=smem, size = 0x4, offset = 0x4, fixed_abs, tag = 'smem constant byte address 0x4 - core index']
  #allocation1 [shape = 'u32[72,128]{1,0:T(1,128)}', space=vmem, size = 0x9000, scoped, tag = 'internal scratch']
  %s0 = inlined_call_operand.vmem [shape: bf16[8,784], index: 0, kind: input, shape index: {}]
  %s1 = inlined_call_operand.hbm [shape: bf16[784,512], index: 1, kind: input, shape index: {}]
  %s2 = inlined_call_operand.vmem [shape: f32[1,512], index: 2, kind: input, shape index: {}]
  %s3 = inlined_call_operand.hbm [shape: bf16[512,512], index: 3, kind: input, shape index: {}]
  %s4 = inlined_call_operand.vmem [shape: f32[1,512], index: 4, kind: input, shape index: {}]
  %s5 = inlined_call_operand.vmem [shape: bf16[512,128], index: 5, kind: input, shape index: {}]
  %s6 = inlined_call_operand.vmem [shape: f32[1,128], index: 6, kind: input, shape index: {}]
  %s7 = inlined_call_operand.hbm [shape: f32[8,128], index: 7, kind: output, shape index: {}]
  %s8 = sld [smem:[#allocation0]]
  $region46: #{mnist_net_forward.1} parent=0
    _
  %s10 = ssub.s32 1, %s8
  %s11 = scalar_select 0, %s10, %s8
  $region1: #{mnist_net_forward.1} parent=0
    #allocation2 [shape = 'u8[802816]{0}', space=vmem, size = 0xc4000, scoped, tag = 'input window, operand 1, single buffered']
    #allocation3 [shape = 's32[1]{0}', space=sflag, size = 0x4, scoped, tag = 'scoped memory for mnist_net_forward.1']
    #allocation4 [shape = 's32[1]{0}', space=sflag, size = 0x4, scoped, tag = 'scoped memory for mnist_net_forward.1']
    #allocation5 [shape = 'u8[524288]{0}', space=vmem, size = 0x80000, scoped, tag = 'input window, operand 3, single buffered']
    #allocation6 [shape = 's32[1]{0}', space=sflag, size = 0x4, scoped, tag = 'scoped memory for mnist_net_forward.1']
    #allocation7 [shape = 'u8[4096]{0}', space=vmem, size = 0x1000, scoped, tag = 'output window, operand 0, single buffered']
    %12 = vsyncpa [#allocation3], 0
    %13 = vsyncpa [#allocation6], 0
    %14 = vsyncpa [#allocation4], 0
    // Predicated region
    $region2: #{mnist_net_forward.1} parent=1 // pred_check
      _
    $region3: #{mnist_net_forward.1} parent=1 // pred_check_branch
      %16 = sbr.rel (0) target = $region5
    $region4: #{mnist_net_forward.1} parent=1 // pred_region
      _
    $region5: #{mnist_net_forward.1} parent=1 // pred_fallthru
      _
    // Predicated region
    $region6: #{mnist_net_forward.1} parent=1 // pred_check
      _
    $region7: #{mnist_net_forward.1} parent=1 // pred_check_branch
      %18 = sbr.rel (0) target = $region9
    $region8: #{mnist_net_forward.1} parent=1 // pred_region
      %20 = vsyncadd [#allocation3], 0
      %s21 = sshll.u32 %s1, 4
      %s22 = int_to_ptr.hbm [resolvable:$true] %s21
      %s23 = sshll.u32 [#allocation2], 4
      %s24 = int_to_ptr.vmem [resolvable:$true] %s23
      %29 = dma.hbm_to_vmem [thread:$0]  %s22, 25088, %s24, [#allocation3], 256, 256, 16
    $region9: #{mnist_net_forward.1} parent=1 // pred_fallthru
      _
    // Predicated region
    $region10: #{mnist_net_forward.1} parent=1 // pred_check
      _
    $region11: #{mnist_net_forward.1} parent=1 // pred_check_branch
      %31 = sbr.rel (0) target = $region13
    $region12: #{mnist_net_forward.1} parent=1 // pred_region
      _
    $region13: #{mnist_net_forward.1} parent=1 // pred_fallthru
      _
    // Predicated region
    $region14: #{mnist_net_forward.1} parent=1 // pred_check
      _
    $region15: #{mnist_net_forward.1} parent=1 // pred_check_branch
      %33 = sbr.rel (0) target = $region17
    $region16: #{mnist_net_forward.1} parent=1 // pred_region
      %35 = vsyncadd [#allocation6], 0
      %s36 = sshll.u32 %s3, 4
      %s37 = int_to_ptr.hbm [resolvable:$true] %s36
      %s38 = sshll.u32 [#allocation5], 4
      %s39 = int_to_ptr.vmem [resolvable:$true] %s38
      %44 = dma.hbm_to_vmem [thread:$0]  %s37, 16384, %s39, [#allocation6], 256, 256, 16
    $region17: #{mnist_net_forward.1} parent=1 // pred_fallthru
      _
    // Predicated region
    $region18: #{mnist_net_forward.1} parent=1 // pred_check
      _
    $region19: #{mnist_net_forward.1} parent=1 // pred_check_branch
      %46 = sbr.rel (0) target = $region21
    $region20: #{mnist_net_forward.1} parent=1 // pred_region
      _
    $region21: #{mnist_net_forward.1} parent=1 // pred_fallthru
      _
    // Predicated region
    $region22: #{mnist_net_forward.1} parent=1 // pred_check
      _
    $region23: #{mnist_net_forward.1} parent=1 // pred_check_branch
      %48 = sbr.rel (0) target = $region25
    $region24: #{mnist_net_forward.1} parent=1 // pred_region
      _
    $region25: #{mnist_net_forward.1} parent=1 // pred_fallthru
      _
    // Predicated region
    $region26: #{mnist_net_forward.1} parent=1 // pred_check
      _
    $region27: #{mnist_net_forward.1} parent=1 // pred_check_branch
      %50 = sbr.rel (0) target = $region29
    $region28: #{mnist_net_forward.1} parent=1 // pred_region
      _
    $region29: #{mnist_net_forward.1} parent=1 // pred_fallthru
      _
    // Predicated region
    $region30: #{mnist_net_forward.1} parent=1 // pred_check
      _
    $region31: #{mnist_net_forward.1} parent=1 // pred_check_branch
      %52 = sbr.rel (0) target = $region33
    $region32: #{mnist_net_forward.1} parent=1 // pred_region
      %54 = dma.done [#allocation3], 25088
    $region33: #{mnist_net_forward.1} parent=1 // pred_fallthru
      _
    // Predicated region
    $region34: #{mnist_net_forward.1} parent=1 // pred_check
      _
    $region35: #{mnist_net_forward.1} parent=1 // pred_check_branch
      %56 = sbr.rel (0) target = $region37
    $region36: #{mnist_net_forward.1} parent=1 // pred_region
      %58 = dma.done [#allocation6], 16384
    $region37: #{mnist_net_forward.1} parent=1 // pred_fallthru
      _
    %v60 = vld [vmem:[%s0] sm:$0xff]
    %v61 = vld [vmem:[%s0 + $0x8] sm:$0xff]
    %v62 = vld [vmem:[%s0 + $0x10] sm:$0xff]
    %v63 = vld [vmem:[%s0 + $0x18] sm:$0xf]
    %v64 = vld [vmem:[#allocation2] sm:$0xff]
    %v65 = vld [vmem:[#allocation2 + $0x8] sm:$0xff]
    %v66 = vld [vmem:[#allocation2 + $0x10] sm:$0xff]
    %v67 = vld [vmem:[#allocation2 + $0x18] sm:$0xff]
    %v68 = vld [vmem:[#allocation2 + $0x20] sm:$0xff]
    %v69 = vld [vmem:[#allocation2 + $0x28] sm:$0xff]
    %v70 = vld [vmem:[#allocation2 + $0x30] sm:$0xff]
    %v71 = vld [vmem:[#allocation2 + $0x38] sm:$0xff]
    %v72 = vld [vmem:[#allocation2 + $0x40] sm:$0xff]
    %v73 = vld [vmem:[#allocation2 + $0x48] sm:$0xff]
    %v74 = vld [vmem:[#allocation2 + $0x50] sm:$0xff]
    %v75 = vld [vmem:[#allocation2 + $0x58] sm:$0xff]
    %v76 = vld [vmem:[#allocation2 + $0x60] sm:$0xff]
    %v77 = vld [vmem:[#allocation2 + $0x68] sm:$0xff]
    %v78 = vld [vmem:[#allocation2 + $0x70] sm:$0xff]
    %v79 = vld [vmem:[#allocation2 + $0x78] sm:$0xff]
    %v80 = vld [vmem:[#allocation2 + $0x80] sm:$0xff]
    %v81 = vld [vmem:[#allocation2 + $0x88] sm:$0xff]
    %v82 = vld [vmem:[#allocation2 + $0x90] sm:$0xff]
    %v83 = vld [vmem:[#allocation2 + $0x98] sm:$0xff]
    %v84 = vld [vmem:[#allocation2 + $0xa0] sm:$0xff]
    %v85 = vld [vmem:[#allocation2 + $0xa8] sm:$0xff]
    %v86 = vld [vmem:[#allocation2 + $0xb0] sm:$0xff]
    %v87 = vld [vmem:[#allocation2 + $0xb8] sm:$0xff]
    %v88 = vld [vmem:[#allocation2 + $0xc0] sm:$0xff]
    %v89 = vld [vmem:[#allocation2 + $0xc8] sm:$0xff]
    %v90 = vld [vmem:[#allocation2 + $0xd0] sm:$0xff]
    %v91 = vld [vmem:[#allocation2 + $0xd8] sm:$0xff]
    %v92 = vld [vmem:[#allocation2 + $0xe0] sm:$0xff]
    %v93 = vld [vmem:[#allocation2 + $0xe8] sm:$0xff]
    %v94 = vld [vmem:[#allocation2 + $0xf0] sm:$0xff]
    %v95 = vld [vmem:[#allocation2 + $0xf8] sm:$0xff]
    %v96 = vld [vmem:[#allocation2 + $0x100] sm:$0xff]
    %v97 = vld [vmem:[#allocation2 + $0x108] sm:$0xff]
    %v98 = vld [vmem:[#allocation2 + $0x110] sm:$0xff]
    %v99 = vld [vmem:[#allocation2 + $0x118] sm:$0xff]
    %v100 = vld [vmem:[#allocation2 + $0x120] sm:$0xff]
    %v101 = vld [vmem:[#allocation2 + $0x128] sm:$0xff]
    %v102 = vld [vmem:[#allocation2 + $0x130] sm:$0xff]
    %v103 = vld [vmem:[#allocation2 + $0x138] sm:$0xff]
    %v104 = vld [vmem:[#allocation2 + $0x140] sm:$0xff]
    %v105 = vld [vmem:[#allocation2 + $0x148] sm:$0xff]
    %v106 = vld [vmem:[#allocation2 + $0x150] sm:$0xff]
    %v107 = vld [vmem:[#allocation2 + $0x158] sm:$0xff]
    %v108 = vld [vmem:[#allocation2 + $0x160] sm:$0xff]
    %v109 = vld [vmem:[#allocation2 + $0x168] sm:$0xff]
    %v110 = vld [vmem:[#allocation2 + $0x170] sm:$0xff]
    %v111 = vld [vmem:[#allocation2 + $0x178] sm:$0xff]
    %v112 = vld [vmem:[#allocation2 + $0x180] sm:$0xff]
    %v113 = vld [vmem:[#allocation2 + $0x188] sm:$0xff]
    %v114 = vld [vmem:[#allocation2 + $0x190] sm:$0xff]
    %v115 = vld [vmem:[#allocation2 + $0x198] sm:$0xff]
    %v116 = vld [vmem:[#allocation2 + $0x1a0] sm:$0xff]
    %v117 = vld [vmem:[#allocation2 + $0x1a8] sm:$0xff]
    %v118 = vld [vmem:[#allocation2 + $0x1b0] sm:$0xff]
    %v119 = vld [vmem:[#allocation2 + $0x1b8] sm:$0xff]
    %v120 = vld [vmem:[#allocation2 + $0x1c0] sm:$0xff]
    %v121 = vld [vmem:[#allocation2 + $0x1c8] sm:$0xff]
    %v122 = vld [vmem:[#allocation2 + $0x1d0] sm:$0xff]
    %v123 = vld [vmem:[#allocation2 + $0x1d8] sm:$0xff]
    %v124 = vld [vmem:[#allocation2 + $0x1e0] sm:$0xff]
    %v125 = vld [vmem:[#allocation2 + $0x1e8] sm:$0xff]
    %v126 = vld [vmem:[#allocation2 + $0x1f0] sm:$0xff]
    %v127 = vld [vmem:[#allocation2 + $0x1f8] sm:$0xff]
    %v128 = vld [vmem:[#allocation2 + $0x200] sm:$0xff]
    %v129 = vld [vmem:[#allocation2 + $0x208] sm:$0xff]
    %v130 = vld [vmem:[#allocation2 + $0x210] sm:$0xff]
    %v131 = vld [vmem:[#allocation2 + $0x218] sm:$0xff]
    %v132 = vld [vmem:[#allocation2 + $0x220] sm:$0xff]
    %v133 = vld [vmem:[#allocation2 + $0x228] sm:$0xff]
    %v134 = vld [vmem:[#allocation2 + $0x230] sm:$0xff]
    %v135 = vld [vmem:[#allocation2 + $0x238] sm:$0xff]
    %v136 = vld [vmem:[#allocation2 + $0x240] sm:$0xff]
    %v137 = vld [vmem:[#allocation2 + $0x248] sm:$0xff]
    %v138 = vld [vmem:[#allocation2 + $0x250] sm:$0xff]
    %v139 = vld [vmem:[#allocation2 + $0x258] sm:$0xff]
    %v140 = vld [vmem:[#allocation2 + $0x260] sm:$0xff]
    %v141 = vld [vmem:[#allocation2 + $0x268] sm:$0xff]
    %v142 = vld [vmem:[#allocation2 + $0x270] sm:$0xff]
    %v143 = vld [vmem:[#allocation2 + $0x278] sm:$0xff]
    %v144 = vld [vmem:[#allocation2 + $0x280] sm:$0xff]
    %v145 = vld [vmem:[#allocation2 + $0x288] sm:$0xff]
    %v146 = vld [vmem:[#allocation2 + $0x290] sm:$0xff]
    %v147 = vld [vmem:[#allocation2 + $0x298] sm:$0xff]
    %v148 = vld [vmem:[#allocation2 + $0x2a0] sm:$0xff]
    %v149 = vld [vmem:[#allocation2 + $0x2a8] sm:$0xff]
    %v150 = vld [vmem:[#allocation2 + $0x2b0] sm:$0xff]
    %v151 = vld [vmem:[#allocation2 + $0x2b8] sm:$0xff]
    %v152 = vld [vmem:[#allocation2 + $0x2c0] sm:$0xff]
    %v153 = vld [vmem:[#allocation2 + $0x2c8] sm:$0xff]
    %v154 = vld [vmem:[#allocation2 + $0x2d0] sm:$0xff]
    %v155 = vld [vmem:[#allocation2 + $0x2d8] sm:$0xff]
    %v156 = vld [vmem:[#allocation2 + $0x2e0] sm:$0xff]
    %v157 = vld [vmem:[#allocation2 + $0x2e8] sm:$0xff]
    %v158 = vld [vmem:[#allocation2 + $0x2f0] sm:$0xff]
    %v159 = vld [vmem:[#allocation2 + $0x2f8] sm:$0xff]
    %v160 = vld [vmem:[#allocation2 + $0x300] sm:$0xff]
    %v161 = vld [vmem:[#allocation2 + $0x308] sm:$0xff]
    %v162 = vld [vmem:[#allocation2 + $0x310] sm:$0xff]
    %v163 = vld [vmem:[#allocation2 + $0x318] sm:$0xff]
    %v164 = vld [vmem:[#allocation2 + $0x320] sm:$0xff]
    %v165 = vld [vmem:[#allocation2 + $0x328] sm:$0xff]
    %v166 = vld [vmem:[#allocation2 + $0x330] sm:$0xff]
    %v167 = vld [vmem:[#allocation2 + $0x338] sm:$0xff]
    %v168 = vld [vmem:[#allocation2 + $0x340] sm:$0xff]
    %v169 = vld [vmem:[#allocation2 + $0x348] sm:$0xff]
    %v170 = vld [vmem:[#allocation2 + $0x350] sm:$0xff]
    %v171 = vld [vmem:[#allocation2 + $0x358] sm:$0xff]
    %v172 = vld [vmem:[#allocation2 + $0x360] sm:$0xff]
    %v173 = vld [vmem:[#allocation2 + $0x368] sm:$0xff]
    %v174 = vld [vmem:[#allocation2 + $0x370] sm:$0xff]
    %v175 = vld [vmem:[#allocation2 + $0x378] sm:$0xff]
    %v176 = vld [vmem:[#allocation2 + $0x380] sm:$0xff]
    %v177 = vld [vmem:[#allocation2 + $0x388] sm:$0xff]
    %v178 = vld [vmem:[#allocation2 + $0x390] sm:$0xff]
    %v179 = vld [vmem:[#allocation2 + $0x398] sm:$0xff]
    %v180 = vld [vmem:[#allocation2 + $0x3a0] sm:$0xff]
    %v181 = vld [vmem:[#allocation2 + $0x3a8] sm:$0xff]
    %v182 = vld [vmem:[#allocation2 + $0x3b0] sm:$0xff]
    %v183 = vld [vmem:[#allocation2 + $0x3b8] sm:$0xff]
    %v184 = vld [vmem:[#allocation2 + $0x3c0] sm:$0xff]
    %v185 = vld [vmem:[#allocation2 + $0x3c8] sm:$0xff]
    %v186 = vld [vmem:[#allocation2 + $0x3d0] sm:$0xff]
    %v187 = vld [vmem:[#allocation2 + $0x3d8] sm:$0xff]
    %v188 = vld [vmem:[#allocation2 + $0x3e0] sm:$0xff]
    %v189 = vld [vmem:[#allocation2 + $0x3e8] sm:$0xff]
    %v190 = vld [vmem:[#allocation2 + $0x3f0] sm:$0xff]
    %v191 = vld [vmem:[#allocation2 + $0x3f8] sm:$0xff]
    %v192 = vld [vmem:[#allocation2 + $0x400] sm:$0xff]
    %v193 = vld [vmem:[#allocation2 + $0x408] sm:$0xff]
    %v194 = vld [vmem:[#allocation2 + $0x410] sm:$0xff]
    %v195 = vld [vmem:[#allocation2 + $0x418] sm:$0xff]
    %v196 = vld [vmem:[#allocation2 + $0x420] sm:$0xff]
    %v197 = vld [vmem:[#allocation2 + $0x428] sm:$0xff]
    %v198 = vld [vmem:[#allocation2 + $0x430] sm:$0xff]
    %v199 = vld [vmem:[#allocation2 + $0x438] sm:$0xff]
    %v200 = vld [vmem:[#allocation2 + $0x440] sm:$0xff]
    %v201 = vld [vmem:[#allocation2 + $0x448] sm:$0xff]
    %v202 = vld [vmem:[#allocation2 + $0x450] sm:$0xff]
    %v203 = vld [vmem:[#allocation2 + $0x458] sm:$0xff]
    %v204 = vld [vmem:[#allocation2 + $0x460] sm:$0xff]
    %v205 = vld [vmem:[#allocation2 + $0x468] sm:$0xff]
    %v206 = vld [vmem:[#allocation2 + $0x470] sm:$0xff]
    %v207 = vld [vmem:[#allocation2 + $0x478] sm:$0xff]
    %v208 = vld [vmem:[#allocation2 + $0x480] sm:$0xff]
    %v209 = vld [vmem:[#allocation2 + $0x488] sm:$0xff]
    %v210 = vld [vmem:[#allocation2 + $0x490] sm:$0xff]
    %v211 = vld [vmem:[#allocation2 + $0x498] sm:$0xff]
    %v212 = vld [vmem:[#allocation2 + $0x4a0] sm:$0xff]
    %v213 = vld [vmem:[#allocation2 + $0x4a8] sm:$0xff]
    %v214 = vld [vmem:[#allocation2 + $0x4b0] sm:$0xff]
    %v215 = vld [vmem:[#allocation2 + $0x4b8] sm:$0xff]
    %v216 = vld [vmem:[#allocation2 + $0x4c0] sm:$0xff]
    %v217 = vld [vmem:[#allocation2 + $0x4c8] sm:$0xff]
    %v218 = vld [vmem:[#allocation2 + $0x4d0] sm:$0xff]
    %v219 = vld [vmem:[#allocation2 + $0x4d8] sm:$0xff]
    %v220 = vld [vmem:[#allocation2 + $0x4e0] sm:$0xff]
    %v221 = vld [vmem:[#allocation2 + $0x4e8] sm:$0xff]
    %v222 = vld [vmem:[#allocation2 + $0x4f0] sm:$0xff]
    %v223 = vld [vmem:[#allocation2 + $0x4f8] sm:$0xff]
    %v224 = vld [vmem:[#allocation2 + $0x500] sm:$0xff]
    %v225 = vld [vmem:[#allocation2 + $0x508] sm:$0xff]
    %v226 = vld [vmem:[#allocation2 + $0x510] sm:$0xff]
    %v227 = vld [vmem:[#allocation2 + $0x518] sm:$0xff]
    %v228 = vld [vmem:[#allocation2 + $0x520] sm:$0xff]
    %v229 = vld [vmem:[#allocation2 + $0x528] sm:$0xff]
    %v230 = vld [vmem:[#allocation2 + $0x530] sm:$0xff]
    %v231 = vld [vmem:[#allocation2 + $0x538] sm:$0xff]
    %v232 = vld [vmem:[#allocation2 + $0x540] sm:$0xff]
    %v233 = vld [vmem:[#allocation2 + $0x548] sm:$0xff]
    %v234 = vld [vmem:[#allocation2 + $0x550] sm:$0xff]
    %v235 = vld [vmem:[#allocation2 + $0x558] sm:$0xff]
    %v236 = vld [vmem:[#allocation2 + $0x560] sm:$0xff]
    %v237 = vld [vmem:[#allocation2 + $0x568] sm:$0xff]
    %v238 = vld [vmem:[#allocation2 + $0x570] sm:$0xff]
    %v239 = vld [vmem:[#allocation2 + $0x578] sm:$0xff]
    %v240 = vld [vmem:[#allocation2 + $0x580] sm:$0xff]
    %v241 = vld [vmem:[#allocation2 + $0x588] sm:$0xff]
    %v242 = vld [vmem:[#allocation2 + $0x590] sm:$0xff]
    %v243 = vld [vmem:[#allocation2 + $0x598] sm:$0xff]
    %v244 = vld [vmem:[#allocation2 + $0x5a0] sm:$0xff]
    %v245 = vld [vmem:[#allocation2 + $0x5a8] sm:$0xff]
    %v246 = vld [vmem:[#allocation2 + $0x5b0] sm:$0xff]
    %v247 = vld [vmem:[#allocation2 + $0x5b8] sm:$0xff]
    %v248 = vld [vmem:[#allocation2 + $0x5c0] sm:$0xff]
    %v249 = vld [vmem:[#allocation2 + $0x5c8] sm:$0xff]
    %v250 = vld [vmem:[#allocation2 + $0x5d0] sm:$0xff]
    %v251 = vld [vmem:[#allocation2 + $0x5d8] sm:$0xff]
    %v252 = vld [vmem:[#allocation2 + $0x5e0] sm:$0xff]
    %v253 = vld [vmem:[#allocation2 + $0x5e8] sm:$0xff]
    %v254 = vld [vmem:[#allocation2 + $0x5f0] sm:$0xff]
    %v255 = vld [vmem:[#allocation2 + $0x5f8] sm:$0xff]
    %v256 = vld [vmem:[#allocation2 + $0x600] sm:$0xff]
    %v257 = vld [vmem:[#allocation2 + $0x608] sm:$0xff]
    %v258 = vld [vmem:[#allocation2 + $0x610] sm:$0xff]
    %v259 = vld [vmem:[#allocation2 + $0x618] sm:$0xff]
    %v260 = vld [vmem:[%s2] sm:$0xf]
    %v262 = vperm.slane %v260, 0
    %v263 = vperm.slane %v260, 1
    %v264 = vperm.slane %v260, 2
    %v265 = vperm.slane %v260, 3
    %v274 = vunpack.c.l.b16 %v60
    %v275 = vunpack.c.h.b16 %v60
    %v276 = vunpack.c.l.b16 %v61
    %v277 = vunpack.c.h.b16 %v61
    %v278 = vunpack.c.l.b16 %v62
    %v279 = vunpack.c.h.b16 %v62
    %v280 = vunpack.c.l.b16 %v63
    %v281 = vpack.c.b16 %v274, %v274
    %v282 = vpack.c.b16 %v275, %v275
    %v283 = vpack.c.b16 %v276, %v276
    %v284 = vpack.c.b16 %v277, %v277
    %v285 = vpack.c.b16 %v278, %v278
    %v286 = vpack.c.b16 %v279, %v279
    %v287 = vpack.c.b16 %v280, %v280
    %v490 = vunpack.c.l.b16 %v64
    %v491 = vunpack.c.h.b16 %v64
    %v492 = vunpack.c.l.b16 %v65
    %v493 = vunpack.c.h.b16 %v65
    %v494 = vunpack.c.l.b16 %v66
    %v495 = vunpack.c.h.b16 %v66
    %v496 = vunpack.c.l.b16 %v67
    %v497 = vunpack.c.h.b16 %v67
    %v498 = vunpack.c.l.b16 %v68
    %v499 = vunpack.c.h.b16 %v68
    %v500 = vunpack.c.l.b16 %v69
    %v501 = vunpack.c.h.b16 %v69
    %v502 = vunpack.c.l.b16 %v70
    %v503 = vunpack.c.h.b16 %v70
    %v504 = vunpack.c.l.b16 %v71
    %v505 = vunpack.c.h.b16 %v71
    %v506 = vunpack.c.l.b16 %v72
    %v507 = vunpack.c.h.b16 %v72
    %v508 = vunpack.c.l.b16 %v73
    %v509 = vunpack.c.h.b16 %v73
    %v510 = vunpack.c.l.b16 %v74
    %v511 = vunpack.c.h.b16 %v74
    %v512 = vunpack.c.l.b16 %v75
    %v513 = vunpack.c.h.b16 %v75
    %v514 = vunpack.c.l.b16 %v76
    %v515 = vunpack.c.h.b16 %v76
    %v516 = vunpack.c.l.b16 %v77
    %v517 = vunpack.c.h.b16 %v77
    %v518 = vunpack.c.l.b16 %v78
    %v519 = vunpack.c.h.b16 %v78
    %v520 = vunpack.c.l.b16 %v79
    %v521 = vunpack.c.h.b16 %v79
    %v522 = vunpack.c.l.b16 %v80
    %v523 = vunpack.c.h.b16 %v80
    %v524 = vunpack.c.l.b16 %v81
    %v525 = vunpack.c.h.b16 %v81
    %v526 = vunpack.c.l.b16 %v82
    %v527 = vunpack.c.h.b16 %v82
    %v528 = vunpack.c.l.b16 %v83
    %v529 = vunpack.c.h.b16 %v83
    %v530 = vunpack.c.l.b16 %v84
    %v531 = vunpack.c.h.b16 %v84
    %v532 = vunpack.c.l.b16 %v85
    %v533 = vunpack.c.h.b16 %v85
    %v534 = vunpack.c.l.b16 %v86
    %v535 = vunpack.c.h.b16 %v86
    %v536 = vunpack.c.l.b16 %v87
    %v537 = vunpack.c.h.b16 %v87
    %v538 = vunpack.c.l.b16 %v88
    %v539 = vunpack.c.h.b16 %v88
    %v540 = vunpack.c.l.b16 %v89
    %v541 = vunpack.c.h.b16 %v89
    %v542 = vunpack.c.l.b16 %v90
    %v543 = vunpack.c.h.b16 %v90
    %v544 = vunpack.c.l.b16 %v91
    %v545 = vunpack.c.h.b16 %v91
    %v546 = vunpack.c.l.b16 %v92
    %v547 = vunpack.c.h.b16 %v92
    %v548 = vunpack.c.l.b16 %v93
    %v549 = vunpack.c.h.b16 %v93
    %v550 = vunpack.c.l.b16 %v94
    %v551 = vunpack.c.h.b16 %v94
    %v552 = vunpack.c.l.b16 %v95
    %v553 = vunpack.c.h.b16 %v95
    %v554 = vunpack.c.l.b16 %v96
    %v555 = vunpack.c.h.b16 %v96
    %v556 = vunpack.c.l.b16 %v97
    %v557 = vunpack.c.h.b16 %v97
    %v558 = vunpack.c.l.b16 %v98
    %v559 = vunpack.c.h.b16 %v98
    %v560 = vunpack.c.l.b16 %v99
    %v561 = vunpack.c.h.b16 %v99
    %v562 = vunpack.c.l.b16 %v100
    %v563 = vunpack.c.h.b16 %v100
    %v564 = vunpack.c.l.b16 %v101
    %v565 = vunpack.c.h.b16 %v101
    %v566 = vunpack.c.l.b16 %v102
    %v567 = vunpack.c.h.b16 %v102
    %v568 = vunpack.c.l.b16 %v103
    %v569 = vunpack.c.h.b16 %v103
    %v570 = vunpack.c.l.b16 %v104
    %v571 = vunpack.c.h.b16 %v104
    %v572 = vunpack.c.l.b16 %v105
    %v573 = vunpack.c.h.b16 %v105
    %v574 = vunpack.c.l.b16 %v106
    %v575 = vunpack.c.h.b16 %v106
    %v576 = vunpack.c.l.b16 %v107
    %v577 = vunpack.c.h.b16 %v107
    %v578 = vunpack.c.l.b16 %v108
    %v579 = vunpack.c.h.b16 %v108
    %v580 = vunpack.c.l.b16 %v109
    %v581 = vunpack.c.h.b16 %v109
    %v582 = vunpack.c.l.b16 %v110
    %v583 = vunpack.c.h.b16 %v110
    %v584 = vunpack.c.l.b16 %v111
    %v585 = vunpack.c.h.b16 %v111
    %v586 = vunpack.c.l.b16 %v112
    %v587 = vunpack.c.h.b16 %v112
    %v588 = vunpack.c.l.b16 %v113
    %v589 = vunpack.c.h.b16 %v113
    %v590 = vunpack.c.l.b16 %v114
    %v591 = vunpack.c.h.b16 %v114
    %v592 = vunpack.c.l.b16 %v115
    %v593 = vunpack.c.h.b16 %v115
    %v594 = vunpack.c.l.b16 %v116
    %v595 = vunpack.c.h.b16 %v116
    %v596 = vunpack.c.l.b16 %v117
    %v597 = vunpack.c.h.b16 %v117
    %v598 = vunpack.c.l.b16 %v118
    %v599 = vunpack.c.h.b16 %v118
    %v600 = vunpack.c.l.b16 %v119
    %v601 = vunpack.c.h.b16 %v119
    %v602 = vunpack.c.l.b16 %v120
    %v603 = vunpack.c.h.b16 %v120
    %v604 = vunpack.c.l.b16 %v121
    %v605 = vunpack.c.h.b16 %v121
    %v606 = vunpack.c.l.b16 %v122
    %v607 = vunpack.c.h.b16 %v122
    %v608 = vunpack.c.l.b16 %v123
    %v609 = vunpack.c.h.b16 %v123
    %v610 = vunpack.c.l.b16 %v124
    %v611 = vunpack.c.h.b16 %v124
    %v612 = vunpack.c.l.b16 %v125
    %v613 = vunpack.c.h.b16 %v125
    %v614 = vunpack.c.l.b16 %v126
    %v615 = vunpack.c.h.b16 %v126
    %v616 = vunpack.c.l.b16 %v127
    %v617 = vunpack.c.h.b16 %v127
    %v618 = vunpack.c.l.b16 %v128
    %v619 = vunpack.c.h.b16 %v128
    %v620 = vunpack.c.l.b16 %v129
    %v621 = vunpack.c.h.b16 %v129
    %v622 = vunpack.c.l.b16 %v130
    %v623 = vunpack.c.h.b16 %v130
    %v624 = vunpack.c.l.b16 %v131
    %v625 = vunpack.c.h.b16 %v131
    %v626 = vunpack.c.l.b16 %v132
    %v627 = vunpack.c.h.b16 %v132
    %v628 = vunpack.c.l.b16 %v133
    %v629 = vunpack.c.h.b16 %v133
    %v630 = vunpack.c.l.b16 %v134
    %v631 = vunpack.c.h.b16 %v134
    %v632 = vunpack.c.l.b16 %v135
    %v633 = vunpack.c.h.b16 %v135
    %v634 = vunpack.c.l.b16 %v136
    %v635 = vunpack.c.h.b16 %v136
    %v636 = vunpack.c.l.b16 %v137
    %v637 = vunpack.c.h.b16 %v137
    %v638 = vunpack.c.l.b16 %v138
    %v639 = vunpack.c.h.b16 %v138
    %v640 = vunpack.c.l.b16 %v139
    %v641 = vunpack.c.h.b16 %v139
    %v642 = vunpack.c.l.b16 %v140
    %v643 = vunpack.c.h.b16 %v140
    %v644 = vunpack.c.l.b16 %v141
    %v645 = vunpack.c.h.b16 %v141
    %v646 = vunpack.c.l.b16 %v142
    %v647 = vunpack.c.h.b16 %v142
    %v648 = vunpack.c.l.b16 %v143
    %v649 = vunpack.c.h.b16 %v143
    %v650 = vunpack.c.l.b16 %v144
    %v651 = vunpack.c.h.b16 %v144
    %v652 = vunpack.c.l.b16 %v145
    %v653 = vunpack.c.h.b16 %v145
    %v654 = vunpack.c.l.b16 %v146
    %v655 = vunpack.c.h.b16 %v146
    %v656 = vunpack.c.l.b16 %v147
    %v657 = vunpack.c.h.b16 %v147
    %v658 = vunpack.c.l.b16 %v148
    %v659 = vunpack.c.h.b16 %v148
    %v660 = vunpack.c.l.b16 %v149
    %v661 = vunpack.c.h.b16 %v149
    %v662 = vunpack.c.l.b16 %v150
    %v663 = vunpack.c.h.b16 %v150
    %v664 = vunpack.c.l.b16 %v151
    %v665 = vunpack.c.h.b16 %v151
    %v666 = vunpack.c.l.b16 %v152
    %v667 = vunpack.c.h.b16 %v152
    %v668 = vunpack.c.l.b16 %v153
    %v669 = vunpack.c.h.b16 %v153
    %v670 = vunpack.c.l.b16 %v154
    %v671 = vunpack.c.h.b16 %v154
    %v672 = vunpack.c.l.b16 %v155
    %v673 = vunpack.c.h.b16 %v155
    %v674 = vunpack.c.l.b16 %v156
    %v675 = vunpack.c.h.b16 %v156
    %v676 = vunpack.c.l.b16 %v157
    %v677 = vunpack.c.h.b16 %v157
    %v678 = vunpack.c.l.b16 %v158
    %v679 = vunpack.c.h.b16 %v158
    %v680 = vunpack.c.l.b16 %v159
    %v681 = vunpack.c.h.b16 %v159
    %v682 = vunpack.c.l.b16 %v160
    %v683 = vunpack.c.h.b16 %v160
    %v684 = vunpack.c.l.b16 %v161
    %v685 = vunpack.c.h.b16 %v161
    %v686 = vunpack.c.l.b16 %v162
    %v687 = vunpack.c.h.b16 %v162
    %v688 = vunpack.c.l.b16 %v163
    %v689 = vunpack.c.h.b16 %v163
    %v690 = vunpack.c.l.b16 %v164
    %v691 = vunpack.c.h.b16 %v164
    %v692 = vunpack.c.l.b16 %v165
    %v693 = vunpack.c.h.b16 %v165
    %v694 = vunpack.c.l.b16 %v166
    %v695 = vunpack.c.h.b16 %v166
    %v696 = vunpack.c.l.b16 %v167
    %v697 = vunpack.c.h.b16 %v167
    %v698 = vunpack.c.l.b16 %v168
    %v699 = vunpack.c.h.b16 %v168
    %v700 = vunpack.c.l.b16 %v169
    %v701 = vunpack.c.h.b16 %v169
    %v702 = vunpack.c.l.b16 %v170
    %v703 = vunpack.c.h.b16 %v170
    %v704 = vunpack.c.l.b16 %v171
    %v705 = vunpack.c.h.b16 %v171
    %v706 = vunpack.c.l.b16 %v172
    %v707 = vunpack.c.h.b16 %v172
    %v708 = vunpack.c.l.b16 %v173
    %v709 = vunpack.c.h.b16 %v173
    %v710 = vunpack.c.l.b16 %v174
    %v711 = vunpack.c.h.b16 %v174
    %v712 = vunpack.c.l.b16 %v175
    %v713 = vunpack.c.h.b16 %v175
    %v714 = vunpack.c.l.b16 %v176
    %v715 = vunpack.c.h.b16 %v176
    %v716 = vunpack.c.l.b16 %v177
    %v717 = vunpack.c.h.b16 %v177
    %v718 = vunpack.c.l.b16 %v178
    %v719 = vunpack.c.h.b16 %v178
    %v720 = vunpack.c.l.b16 %v179
    %v721 = vunpack.c.h.b16 %v179
    %v722 = vunpack.c.l.b16 %v180
    %v723 = vunpack.c.h.b16 %v180
    %v724 = vunpack.c.l.b16 %v181
    %v725 = vunpack.c.h.b16 %v181
    %v726 = vunpack.c.l.b16 %v182
    %v727 = vunpack.c.h.b16 %v182
    %v728 = vunpack.c.l.b16 %v183
    %v729 = vunpack.c.h.b16 %v183
    %v730 = vunpack.c.l.b16 %v184
    %v731 = vunpack.c.h.b16 %v184
    %v732 = vunpack.c.l.b16 %v185
    %v733 = vunpack.c.h.b16 %v185
    %v734 = vunpack.c.l.b16 %v186
    %v735 = vunpack.c.h.b16 %v186
    %v736 = vunpack.c.l.b16 %v187
    %v737 = vunpack.c.h.b16 %v187
    %v738 = vunpack.c.l.b16 %v188
    %v739 = vunpack.c.h.b16 %v188
    %v740 = vunpack.c.l.b16 %v189
    %v741 = vunpack.c.h.b16 %v189
    %v742 = vunpack.c.l.b16 %v190
    %v743 = vunpack.c.h.b16 %v190
    %v744 = vunpack.c.l.b16 %v191
    %v745 = vunpack.c.h.b16 %v191
    %v746 = vunpack.c.l.b16 %v192
    %v747 = vunpack.c.h.b16 %v192
    %v748 = vunpack.c.l.b16 %v193
    %v749 = vunpack.c.h.b16 %v193
    %v750 = vunpack.c.l.b16 %v194
    %v751 = vunpack.c.h.b16 %v194
    %v752 = vunpack.c.l.b16 %v195
    %v753 = vunpack.c.h.b16 %v195
    %v754 = vunpack.c.l.b16 %v196
    %v755 = vunpack.c.h.b16 %v196
    %v756 = vunpack.c.l.b16 %v197
    %v757 = vunpack.c.h.b16 %v197
    %v758 = vunpack.c.l.b16 %v198
    %v759 = vunpack.c.h.b16 %v198
    %v760 = vunpack.c.l.b16 %v199
    %v761 = vunpack.c.h.b16 %v199
    %v762 = vunpack.c.l.b16 %v200
    %v763 = vunpack.c.h.b16 %v200
    %v764 = vunpack.c.l.b16 %v201
    %v765 = vunpack.c.h.b16 %v201
    %v766 = vunpack.c.l.b16 %v202
    %v767 = vunpack.c.h.b16 %v202
    %v768 = vunpack.c.l.b16 %v203
    %v769 = vunpack.c.h.b16 %v203
    %v770 = vunpack.c.l.b16 %v204
    %v771 = vunpack.c.h.b16 %v204
    %v772 = vunpack.c.l.b16 %v205
    %v773 = vunpack.c.h.b16 %v205
    %v774 = vunpack.c.l.b16 %v206
    %v775 = vunpack.c.h.b16 %v206
    %v776 = vunpack.c.l.b16 %v207
    %v777 = vunpack.c.h.b16 %v207
    %v778 = vunpack.c.l.b16 %v208
    %v779 = vunpack.c.h.b16 %v208
    %v780 = vunpack.c.l.b16 %v209
    %v781 = vunpack.c.h.b16 %v209
    %v782 = vunpack.c.l.b16 %v210
    %v783 = vunpack.c.h.b16 %v210
    %v784 = vunpack.c.l.b16 %v211
    %v785 = vunpack.c.h.b16 %v211
    %v786 = vunpack.c.l.b16 %v212
    %v787 = vunpack.c.h.b16 %v212
    %v788 = vunpack.c.l.b16 %v213
    %v789 = vunpack.c.h.b16 %v213
    %v790 = vunpack.c.l.b16 %v214
    %v791 = vunpack.c.h.b16 %v214
    %v792 = vunpack.c.l.b16 %v215
    %v793 = vunpack.c.h.b16 %v215
    %v794 = vunpack.c.l.b16 %v216
    %v795 = vunpack.c.h.b16 %v216
    %v796 = vunpack.c.l.b16 %v217
    %v797 = vunpack.c.h.b16 %v217
    %v798 = vunpack.c.l.b16 %v218
    %v799 = vunpack.c.h.b16 %v218
    %v800 = vunpack.c.l.b16 %v219
    %v801 = vunpack.c.h.b16 %v219
    %v802 = vunpack.c.l.b16 %v220
    %v803 = vunpack.c.h.b16 %v220
    %v804 = vunpack.c.l.b16 %v221
    %v805 = vunpack.c.h.b16 %v221
    %v806 = vunpack.c.l.b16 %v222
    %v807 = vunpack.c.h.b16 %v222
    %v808 = vunpack.c.l.b16 %v223
    %v809 = vunpack.c.h.b16 %v223
    %v810 = vunpack.c.l.b16 %v224
    %v811 = vunpack.c.h.b16 %v224
    %v812 = vunpack.c.l.b16 %v225
    %v813 = vunpack.c.h.b16 %v225
    %v814 = vunpack.c.l.b16 %v226
    %v815 = vunpack.c.h.b16 %v226
    %v816 = vunpack.c.l.b16 %v227
    %v817 = vunpack.c.h.b16 %v227
    %v818 = vunpack.c.l.b16 %v228
    %v819 = vunpack.c.h.b16 %v228
    %v820 = vunpack.c.l.b16 %v229
    %v821 = vunpack.c.h.b16 %v229
    %v822 = vunpack.c.l.b16 %v230
    %v823 = vunpack.c.h.b16 %v230
    %v824 = vunpack.c.l.b16 %v231
    %v825 = vunpack.c.h.b16 %v231
    %v826 = vunpack.c.l.b16 %v232
    %v827 = vunpack.c.h.b16 %v232
    %v828 = vunpack.c.l.b16 %v233
    %v829 = vunpack.c.h.b16 %v233
    %v830 = vunpack.c.l.b16 %v234
    %v831 = vunpack.c.h.b16 %v234
    %v832 = vunpack.c.l.b16 %v235
    %v833 = vunpack.c.h.b16 %v235
    %v834 = vunpack.c.l.b16 %v236
    %v835 = vunpack.c.h.b16 %v236
    %v836 = vunpack.c.l.b16 %v237
    %v837 = vunpack.c.h.b16 %v237
    %v838 = vunpack.c.l.b16 %v238
    %v839 = vunpack.c.h.b16 %v238
    %v840 = vunpack.c.l.b16 %v239
    %v841 = vunpack.c.h.b16 %v239
    %v842 = vunpack.c.l.b16 %v240
    %v843 = vunpack.c.h.b16 %v240
    %v844 = vunpack.c.l.b16 %v241
    %v845 = vunpack.c.h.b16 %v241
    %v846 = vunpack.c.l.b16 %v242
    %v847 = vunpack.c.h.b16 %v242
    %v848 = vunpack.c.l.b16 %v243
    %v849 = vunpack.c.h.b16 %v243
    %v850 = vunpack.c.l.b16 %v244
    %v851 = vunpack.c.h.b16 %v244
    %v852 = vunpack.c.l.b16 %v245
    %v853 = vunpack.c.h.b16 %v245
    %v854 = vunpack.c.l.b16 %v246
    %v855 = vunpack.c.h.b16 %v246
    %v856 = vunpack.c.l.b16 %v247
    %v857 = vunpack.c.h.b16 %v247
    %v858 = vunpack.c.l.b16 %v248
    %v859 = vunpack.c.h.b16 %v248
    %v860 = vunpack.c.l.b16 %v249
    %v861 = vunpack.c.h.b16 %v249
    %v862 = vunpack.c.l.b16 %v250
    %v863 = vunpack.c.h.b16 %v250
    %v864 = vunpack.c.l.b16 %v251
    %v865 = vunpack.c.h.b16 %v251
    %v866 = vunpack.c.l.b16 %v252
    %v867 = vunpack.c.h.b16 %v252
    %v868 = vunpack.c.l.b16 %v253
    %v869 = vunpack.c.h.b16 %v253
    %v870 = vunpack.c.l.b16 %v254
    %v871 = vunpack.c.h.b16 %v254
    %v872 = vunpack.c.l.b16 %v255
    %v873 = vunpack.c.h.b16 %v255
    %v874 = vunpack.c.l.b16 %v256
    %v875 = vunpack.c.h.b16 %v256
    %v876 = vunpack.c.l.b16 %v257
    %v877 = vunpack.c.h.b16 %v257
    %v878 = vunpack.c.l.b16 %v258
    %v879 = vunpack.c.h.b16 %v258
    %v880 = vunpack.c.l.b16 %v259
    %v881 = vunpack.c.h.b16 %v259
    %v882 = vpack.c.b16 %v494, %v490
    %v883 = vpack.c.b16 %v495, %v491
    %v884 = vpack.c.b16 %v496, %v492
    %v885 = vpack.c.b16 %v497, %v493
    %v886 = vpack.c.b16 %v502, %v498
    %v887 = vpack.c.b16 %v503, %v499
    %v888 = vpack.c.b16 %v504, %v500
    %v889 = vpack.c.b16 %v505, %v501
    %v890 = vpack.c.b16 %v510, %v506
    %v891 = vpack.c.b16 %v511, %v507
    %v892 = vpack.c.b16 %v512, %v508
    %v893 = vpack.c.b16 %v513, %v509
    %v894 = vpack.c.b16 %v518, %v514
    %v895 = vpack.c.b16 %v519, %v515
    %v896 = vpack.c.b16 %v520, %v516
    %v897 = vpack.c.b16 %v521, %v517
    %v898 = vpack.c.b16 %v526, %v522
    %v899 = vpack.c.b16 %v527, %v523
    %v900 = vpack.c.b16 %v528, %v524
    %v901 = vpack.c.b16 %v529, %v525
    %v902 = vpack.c.b16 %v534, %v530
    %v903 = vpack.c.b16 %v535, %v531
    %v904 = vpack.c.b16 %v536, %v532
    %v905 = vpack.c.b16 %v537, %v533
    %v906 = vpack.c.b16 %v542, %v538
    %v907 = vpack.c.b16 %v543, %v539
    %v908 = vpack.c.b16 %v544, %v540
    %v909 = vpack.c.b16 %v545, %v541
    %v910 = vpack.c.b16 %v550, %v546
    %v911 = vpack.c.b16 %v551, %v547
    %v912 = vpack.c.b16 %v552, %v548
    %v913 = vpack.c.b16 %v553, %v549
    %v914 = vpack.c.b16 %v558, %v554
    %v915 = vpack.c.b16 %v559, %v555
    %v916 = vpack.c.b16 %v560, %v556
    %v917 = vpack.c.b16 %v561, %v557
    %v918 = vpack.c.b16 %v566, %v562
    %v919 = vpack.c.b16 %v567, %v563
    %v920 = vpack.c.b16 %v568, %v564
    %v921 = vpack.c.b16 %v569, %v565
    %v922 = vpack.c.b16 %v574, %v570
    %v923 = vpack.c.b16 %v575, %v571
    %v924 = vpack.c.b16 %v576, %v572
    %v925 = vpack.c.b16 %v577, %v573
    %v926 = vpack.c.b16 %v582, %v578
    %v927 = vpack.c.b16 %v583, %v579
    %v928 = vpack.c.b16 %v584, %v580
    %v929 = vpack.c.b16 %v585, %v581
    %v930 = vpack.c.b16 %v590, %v586
    %v931 = vpack.c.b16 %v591, %v587
    %v932 = vpack.c.b16 %v592, %v588
    %v933 = vpack.c.b16 %v593, %v589
    %v934 = vpack.c.b16 %v598, %v594
    %v935 = vpack.c.b16 %v599, %v595
    %v936 = vpack.c.b16 %v600, %v596
    %v937 = vpack.c.b16 %v601, %v597
    %v938 = vpack.c.b16 %v606, %v602
    %v939 = vpack.c.b16 %v607, %v603
    %v940 = vpack.c.b16 %v608, %v604
    %v941 = vpack.c.b16 %v609, %v605
    %v942 = vpack.c.b16 %v614, %v610
    %v943 = vpack.c.b16 %v615, %v611
    %v944 = vpack.c.b16 %v616, %v612
    %v945 = vpack.c.b16 %v617, %v613
    %v946 = vpack.c.b16 %v622, %v618
    %v947 = vpack.c.b16 %v623, %v619
    %v948 = vpack.c.b16 %v624, %v620
    %v949 = vpack.c.b16 %v625, %v621
    %v950 = vpack.c.b16 %v630, %v626
    %v951 = vpack.c.b16 %v631, %v627
    %v952 = vpack.c.b16 %v632, %v628
    %v953 = vpack.c.b16 %v633, %v629
    %v954 = vpack.c.b16 %v638, %v634
    %v955 = vpack.c.b16 %v639, %v635
    %v956 = vpack.c.b16 %v640, %v636
    %v957 = vpack.c.b16 %v641, %v637
    %v958 = vpack.c.b16 %v646, %v642
    %v959 = vpack.c.b16 %v647, %v643
    %v960 = vpack.c.b16 %v648, %v644
    %v961 = vpack.c.b16 %v649, %v645
    %v962 = vpack.c.b16 %v654, %v650
    %v963 = vpack.c.b16 %v655, %v651
    %v964 = vpack.c.b16 %v656, %v652
    %v965 = vpack.c.b16 %v657, %v653
    %v966 = vpack.c.b16 %v662, %v658
    %v967 = vpack.c.b16 %v663, %v659
    %v968 = vpack.c.b16 %v664, %v660
    %v969 = vpack.c.b16 %v665, %v661
    %v970 = vpack.c.b16 %v670, %v666
    %v971 = vpack.c.b16 %v671, %v667
    %v972 = vpack.c.b16 %v672, %v668
    %v973 = vpack.c.b16 %v673, %v669
    %v974 = vpack.c.b16 %v678, %v674
    %v975 = vpack.c.b16 %v679, %v675
    %v976 = vpack.c.b16 %v680, %v676
    %v977 = vpack.c.b16 %v681, %v677
    %v978 = vpack.c.b16 %v686, %v682
    %v979 = vpack.c.b16 %v687, %v683
    %v980 = vpack.c.b16 %v688, %v684
    %v981 = vpack.c.b16 %v689, %v685
    %v982 = vpack.c.b16 %v694, %v690
    %v983 = vpack.c.b16 %v695, %v691
    %v984 = vpack.c.b16 %v696, %v692
    %v985 = vpack.c.b16 %v697, %v693
    %v986 = vpack.c.b16 %v702, %v698
    %v987 = vpack.c.b16 %v703, %v699
    %v988 = vpack.c.b16 %v704, %v700
    %v989 = vpack.c.b16 %v705, %v701
    %v990 = vpack.c.b16 %v710, %v706
    %v991 = vpack.c.b16 %v711, %v707
    %v992 = vpack.c.b16 %v712, %v708
    %v993 = vpack.c.b16 %v713, %v709
    %v994 = vpack.c.b16 %v718, %v714
    %v995 = vpack.c.b16 %v719, %v715
    %v996 = vpack.c.b16 %v720, %v716
    %v997 = vpack.c.b16 %v721, %v717
    %v998 = vpack.c.b16 %v726, %v722
    %v999 = vpack.c.b16 %v727, %v723
    %v1000 = vpack.c.b16 %v728, %v724
    %v1001 = vpack.c.b16 %v729, %v725
    %v1002 = vpack.c.b16 %v734, %v730
    %v1003 = vpack.c.b16 %v735, %v731
    %v1004 = vpack.c.b16 %v736, %v732
    %v1005 = vpack.c.b16 %v737, %v733
    %v1006 = vpack.c.b16 %v742, %v738
    %v1007 = vpack.c.b16 %v743, %v739
    %v1008 = vpack.c.b16 %v744, %v740
    %v1009 = vpack.c.b16 %v745, %v741
    %v1010 = vpack.c.b16 %v750, %v746
    %v1011 = vpack.c.b16 %v751, %v747
    %v1012 = vpack.c.b16 %v752, %v748
    %v1013 = vpack.c.b16 %v753, %v749
    %v1014 = vpack.c.b16 %v758, %v754
    %v1015 = vpack.c.b16 %v759, %v755
    %v1016 = vpack.c.b16 %v760, %v756
    %v1017 = vpack.c.b16 %v761, %v757
    %v1018 = vpack.c.b16 %v766, %v762
    %v1019 = vpack.c.b16 %v767, %v763
    %v1020 = vpack.c.b16 %v768, %v764
    %v1021 = vpack.c.b16 %v769, %v765
    %v1022 = vpack.c.b16 %v774, %v770
    %v1023 = vpack.c.b16 %v775, %v771
    %v1024 = vpack.c.b16 %v776, %v772
    %v1025 = vpack.c.b16 %v777, %v773
    %v1026 = vpack.c.b16 %v782, %v778
    %v1027 = vpack.c.b16 %v783, %v779
    %v1028 = vpack.c.b16 %v784, %v780
    %v1029 = vpack.c.b16 %v785, %v781
    %v1030 = vpack.c.b16 %v790, %v786
    %v1031 = vpack.c.b16 %v791, %v787
    %v1032 = vpack.c.b16 %v792, %v788
    %v1033 = vpack.c.b16 %v793, %v789
    %v1034 = vpack.c.b16 %v798, %v794
    %v1035 = vpack.c.b16 %v799, %v795
    %v1036 = vpack.c.b16 %v800, %v796
    %v1037 = vpack.c.b16 %v801, %v797
    %v1038 = vpack.c.b16 %v806, %v802
    %v1039 = vpack.c.b16 %v807, %v803
    %v1040 = vpack.c.b16 %v808, %v804
    %v1041 = vpack.c.b16 %v809, %v805
    %v1042 = vpack.c.b16 %v814, %v810
    %v1043 = vpack.c.b16 %v815, %v811
    %v1044 = vpack.c.b16 %v816, %v812
    %v1045 = vpack.c.b16 %v817, %v813
    %v1046 = vpack.c.b16 %v822, %v818
    %v1047 = vpack.c.b16 %v823, %v819
    %v1048 = vpack.c.b16 %v824, %v820
    %v1049 = vpack.c.b16 %v825, %v821
    %v1050 = vpack.c.b16 %v830, %v826
    %v1051 = vpack.c.b16 %v831, %v827
    %v1052 = vpack.c.b16 %v832, %v828
    %v1053 = vpack.c.b16 %v833, %v829
    %v1054 = vpack.c.b16 %v838, %v834
    %v1055 = vpack.c.b16 %v839, %v835
    %v1056 = vpack.c.b16 %v840, %v836
    %v1057 = vpack.c.b16 %v841, %v837
    %v1058 = vpack.c.b16 %v846, %v842
    %v1059 = vpack.c.b16 %v847, %v843
    %v1060 = vpack.c.b16 %v848, %v844
    %v1061 = vpack.c.b16 %v849, %v845
    %v1062 = vpack.c.b16 %v854, %v850
    %v1063 = vpack.c.b16 %v855, %v851
    %v1064 = vpack.c.b16 %v856, %v852
    %v1065 = vpack.c.b16 %v857, %v853
    %v1066 = vpack.c.b16 %v862, %v858
    %v1067 = vpack.c.b16 %v863, %v859
    %v1068 = vpack.c.b16 %v864, %v860
    %v1069 = vpack.c.b16 %v865, %v861
    %v1070 = vpack.c.b16 %v870, %v866
    %v1071 = vpack.c.b16 %v871, %v867
    %v1072 = vpack.c.b16 %v872, %v868
    %v1073 = vpack.c.b16 %v873, %v869
    %v1074 = vpack.c.b16 %v878, %v874
    %v1075 = vpack.c.b16 %v879, %v875
    %v1076 = vpack.c.b16 %v880, %v876
    %v1077 = vpack.c.b16 %v881, %v877
    %vm1274 = vcmask 130048
    %v1276 = vsel %vm1274, %v287, 0
    %1278 = vmatpush.bf16.msra.mxu0 %v910
    %1279 = vmatpush.bf16.msra.mxu0 %v906
    %1280 = vmatpush.bf16.msra.mxu0 %v902
    %1281 = vmatpush.bf16.msra.mxu0 %v898
    %1282 = vmatpush.bf16.msra.mxu0 %v894
    %1283 = vmatpush.bf16.msra.mxu0 %v890
    %1284 = vmatpush.bf16.msra.mxu0 %v886
    %1285 = vmatpush.bf16.msra.mxu0 %v882
    %1286 = vmatmul.bf16.gmra.mxu0 %v281
    %v1287 = vpop.f32.mrf.mxu0
    %v1288 = vadd.f32 %v262, %v1287
    %v1289 = vpop.f32.mrf.mxu0
    %1290 = vdwg.mxu0
    %1291 = vmatpush.bf16.msra.mxu0 %v942
    %1292 = vmatpush.bf16.msra.mxu0 %v938
    %1293 = vmatpush.bf16.msra.mxu0 %v934
    %1294 = vmatpush.bf16.msra.mxu0 %v930
    %1295 = vmatpush.bf16.msra.mxu0 %v926
    %1296 = vmatpush.bf16.msra.mxu0 %v922
    %1297 = vmatpush.bf16.msra.mxu0 %v918
    %1298 = vmatpush.bf16.msra.mxu0 %v914
    %1299 = vmatmul.bf16.gmra.mxu0 %v282
    %v1300 = vpop.f32.mrf.mxu0
    %v1301 = vadd.f32 %v1288, %v1300
    %v1302 = vpop.f32.mrf.mxu0
    %1303 = vdwg.mxu0
    %1304 = vmatpush.bf16.msra.mxu0 %v974
    %1305 = vmatpush.bf16.msra.mxu0 %v970
    %1306 = vmatpush.bf16.msra.mxu0 %v966
    %1307 = vmatpush.bf16.msra.mxu0 %v962
    %1308 = vmatpush.bf16.msra.mxu0 %v958
    %1309 = vmatpush.bf16.msra.mxu0 %v954
    %1310 = vmatpush.bf16.msra.mxu0 %v950
    %1311 = vmatpush.bf16.msra.mxu0 %v946
    %1312 = vmatmul.bf16.gmra.mxu0 %v283
    %v1313 = vpop.f32.mrf.mxu0
    %v1314 = vadd.f32 %v1301, %v1313
    %v1315 = vpop.f32.mrf.mxu0
    %1316 = vdwg.mxu0
    %1317 = vmatpush.bf16.msra.mxu0 %v1006
    %1318 = vmatpush.bf16.msra.mxu0 %v1002
    %1319 = vmatpush.bf16.msra.mxu0 %v998
    %1320 = vmatpush.bf16.msra.mxu0 %v994
    %1321 = vmatpush.bf16.msra.mxu0 %v990
    %1322 = vmatpush.bf16.msra.mxu0 %v986
    %1323 = vmatpush.bf16.msra.mxu0 %v982
    %1324 = vmatpush.bf16.msra.mxu0 %v978
    %1325 = vmatmul.bf16.gmra.mxu0 %v284
    %v1326 = vpop.f32.mrf.mxu0
    %v1327 = vadd.f32 %v1314, %v1326
    %v1328 = vpop.f32.mrf.mxu0
    %1329 = vdwg.mxu0
    %1330 = vmatpush.bf16.msra.mxu0 %v1038
    %1331 = vmatpush.bf16.msra.mxu0 %v1034
    %1332 = vmatpush.bf16.msra.mxu0 %v1030
    %1333 = vmatpush.bf16.msra.mxu0 %v1026
    %1334 = vmatpush.bf16.msra.mxu0 %v1022
    %1335 = vmatpush.bf16.msra.mxu0 %v1018
    %1336 = vmatpush.bf16.msra.mxu0 %v1014
    %1337 = vmatpush.bf16.msra.mxu0 %v1010
    %1338 = vmatmul.bf16.gmra.mxu0 %v285
    %v1339 = vpop.f32.mrf.mxu0
    %v1340 = vadd.f32 %v1327, %v1339
    %v1341 = vpop.f32.mrf.mxu0
    %1342 = vdwg.mxu0
    %1343 = vmatpush.bf16.msra.mxu0 %v1070
    %1344 = vmatpush.bf16.msra.mxu0 %v1066
    %1345 = vmatpush.bf16.msra.mxu0 %v1062
    %1346 = vmatpush.bf16.msra.mxu0 %v1058
    %1347 = vmatpush.bf16.msra.mxu0 %v1054
    %1348 = vmatpush.bf16.msra.mxu0 %v1050
    %1349 = vmatpush.bf16.msra.mxu0 %v1046
    %1350 = vmatpush.bf16.msra.mxu0 %v1042
    %1351 = vmatmul.bf16.gmra.mxu0 %v286
    %v1352 = vpop.f32.mrf.mxu0
    %v1353 = vadd.f32 %v1340, %v1352
    %v1354 = vpop.f32.mrf.mxu0
    %1355 = vdwg.mxu0
    %1356 = vmatpush.bf16.msra.mxu0 0
    %1357 = vmatpush.bf16.msra.mxu0 0
    %1358 = vmatpush.bf16.msra.mxu0 0
    %1359 = vmatpush.bf16.msra.mxu0 0
    %1360 = vmatpush.bf16.msra.mxu0 0
    %1361 = vmatpush.bf16.msra.mxu0 0
    %1362 = vmatpush.bf16.msra.mxu0 0
    %1363 = vmatpush.bf16.msra.mxu0 %v1074
    %1364 = vmatmul.bf16.gmra.mxu0 %v1276
    %v1365 = vpop.f32.mrf.mxu0
    %v1366 = vadd.f32 %v1353, %v1365
    %v1367 = vpop.f32.mrf.mxu0
    %1368 = vdwg.mxu0
    %1369 = vmatpush.bf16.msra.mxu0 %v911
    %1370 = vmatpush.bf16.msra.mxu0 %v907
    %1371 = vmatpush.bf16.msra.mxu0 %v903
    %1372 = vmatpush.bf16.msra.mxu0 %v899
    %1373 = vmatpush.bf16.msra.mxu0 %v895
    %1374 = vmatpush.bf16.msra.mxu0 %v891
    %1375 = vmatpush.bf16.msra.mxu0 %v887
    %1376 = vmatpush.bf16.msra.mxu0 %v883
    %1377 = vmatmul.bf16.gmra.mxu0 %v281
    %v1378 = vpop.f32.mrf.mxu0
    %v1379 = vadd.f32 %v263, %v1378
    %v1380 = vpop.f32.mrf.mxu0
    %1381 = vdwg.mxu0
    %1382 = vmatpush.bf16.msra.mxu0 %v943
    %1383 = vmatpush.bf16.msra.mxu0 %v939
    %1384 = vmatpush.bf16.msra.mxu0 %v935
    %1385 = vmatpush.bf16.msra.mxu0 %v931
    %1386 = vmatpush.bf16.msra.mxu0 %v927
    %1387 = vmatpush.bf16.msra.mxu0 %v923
    %1388 = vmatpush.bf16.msra.mxu0 %v919
    %1389 = vmatpush.bf16.msra.mxu0 %v915
    %1390 = vmatmul.bf16.gmra.mxu0 %v282
    %v1391 = vpop.f32.mrf.mxu0
    %v1392 = vadd.f32 %v1379, %v1391
    %v1393 = vpop.f32.mrf.mxu0
    %1394 = vdwg.mxu0
    %1395 = vmatpush.bf16.msra.mxu0 %v975
    %1396 = vmatpush.bf16.msra.mxu0 %v971
    %1397 = vmatpush.bf16.msra.mxu0 %v967
    %1398 = vmatpush.bf16.msra.mxu0 %v963
    %1399 = vmatpush.bf16.msra.mxu0 %v959
    %1400 = vmatpush.bf16.msra.mxu0 %v955
    %1401 = vmatpush.bf16.msra.mxu0 %v951
    %1402 = vmatpush.bf16.msra.mxu0 %v947
    %1403 = vmatmul.bf16.gmra.mxu0 %v283
    %v1404 = vpop.f32.mrf.mxu0
    %v1405 = vadd.f32 %v1392, %v1404
    %v1406 = vpop.f32.mrf.mxu0
    %1407 = vdwg.mxu0
    %1408 = vmatpush.bf16.msra.mxu0 %v1007
    %1409 = vmatpush.bf16.msra.mxu0 %v1003
    %1410 = vmatpush.bf16.msra.mxu0 %v999
    %1411 = vmatpush.bf16.msra.mxu0 %v995
    %1412 = vmatpush.bf16.msra.mxu0 %v991
    %1413 = vmatpush.bf16.msra.mxu0 %v987
    %1414 = vmatpush.bf16.msra.mxu0 %v983
    %1415 = vmatpush.bf16.msra.mxu0 %v979
    %1416 = vmatmul.bf16.gmra.mxu0 %v284
    %v1417 = vpop.f32.mrf.mxu0
    %v1418 = vadd.f32 %v1405, %v1417
    %v1419 = vpop.f32.mrf.mxu0
    %1420 = vdwg.mxu0
    %1421 = vmatpush.bf16.msra.mxu0 %v1039
    %1422 = vmatpush.bf16.msra.mxu0 %v1035
    %1423 = vmatpush.bf16.msra.mxu0 %v1031
    %1424 = vmatpush.bf16.msra.mxu0 %v1027
    %1425 = vmatpush.bf16.msra.mxu0 %v1023
    %1426 = vmatpush.bf16.msra.mxu0 %v1019
    %1427 = vmatpush.bf16.msra.mxu0 %v1015
    %1428 = vmatpush.bf16.msra.mxu0 %v1011
    %1429 = vmatmul.bf16.gmra.mxu0 %v285
    %v1430 = vpop.f32.mrf.mxu0
    %v1431 = vadd.f32 %v1418, %v1430
    %v1432 = vpop.f32.mrf.mxu0
    %1433 = vdwg.mxu0
    %1434 = vmatpush.bf16.msra.mxu0 %v1071
    %1435 = vmatpush.bf16.msra.mxu0 %v1067
    %1436 = vmatpush.bf16.msra.mxu0 %v1063
    %1437 = vmatpush.bf16.msra.mxu0 %v1059
    %1438 = vmatpush.bf16.msra.mxu0 %v1055
    %1439 = vmatpush.bf16.msra.mxu0 %v1051
    %1440 = vmatpush.bf16.msra.mxu0 %v1047
    %1441 = vmatpush.bf16.msra.mxu0 %v1043
    %1442 = vmatmul.bf16.gmra.mxu0 %v286
    %v1443 = vpop.f32.mrf.mxu0
    %v1444 = vadd.f32 %v1431, %v1443
    %v1445 = vpop.f32.mrf.mxu0
    %1446 = vdwg.mxu0
    %1447 = vmatpush.bf16.msra.mxu0 0
    %1448 = vmatpush.bf16.msra.mxu0 0
    %1449 = vmatpush.bf16.msra.mxu0 0
    %1450 = vmatpush.bf16.msra.mxu0 0
    %1451 = vmatpush.bf16.msra.mxu0 0
    %1452 = vmatpush.bf16.msra.mxu0 0
    %1453 = vmatpush.bf16.msra.mxu0 0
    %1454 = vmatpush.bf16.msra.mxu0 %v1075
    %1455 = vmatmul.bf16.gmra.mxu0 %v1276
    %v1456 = vpop.f32.mrf.mxu0
    %v1457 = vadd.f32 %v1444, %v1456
    %v1458 = vpop.f32.mrf.mxu0
    %1459 = vdwg.mxu0
    %1460 = vmatpush.bf16.msra.mxu0 %v912
    %1461 = vmatpush.bf16.msra.mxu0 %v908
    %1462 = vmatpush.bf16.msra.mxu0 %v904
    %1463 = vmatpush.bf16.msra.mxu0 %v900
    %1464 = vmatpush.bf16.msra.mxu0 %v896
    %1465 = vmatpush.bf16.msra.mxu0 %v892
    %1466 = vmatpush.bf16.msra.mxu0 %v888
    %1467 = vmatpush.bf16.msra.mxu0 %v884
    %1468 = vmatmul.bf16.gmra.mxu0 %v281
    %v1469 = vpop.f32.mrf.mxu0
    %v1470 = vadd.f32 %v264, %v1469
    %v1471 = vpop.f32.mrf.mxu0
    %1472 = vdwg.mxu0
    %1473 = vmatpush.bf16.msra.mxu0 %v944
    %1474 = vmatpush.bf16.msra.mxu0 %v940
    %1475 = vmatpush.bf16.msra.mxu0 %v936
    %1476 = vmatpush.bf16.msra.mxu0 %v932
    %1477 = vmatpush.bf16.msra.mxu0 %v928
    %1478 = vmatpush.bf16.msra.mxu0 %v924
    %1479 = vmatpush.bf16.msra.mxu0 %v920
    %1480 = vmatpush.bf16.msra.mxu0 %v916
    %1481 = vmatmul.bf16.gmra.mxu0 %v282
    %v1482 = vpop.f32.mrf.mxu0
    %v1483 = vadd.f32 %v1470, %v1482
    %v1484 = vpop.f32.mrf.mxu0
    %1485 = vdwg.mxu0
    %1486 = vmatpush.bf16.msra.mxu0 %v976
    %1487 = vmatpush.bf16.msra.mxu0 %v972
    %1488 = vmatpush.bf16.msra.mxu0 %v968
    %1489 = vmatpush.bf16.msra.mxu0 %v964
    %1490 = vmatpush.bf16.msra.mxu0 %v960
    %1491 = vmatpush.bf16.msra.mxu0 %v956
    %1492 = vmatpush.bf16.msra.mxu0 %v952
    %1493 = vmatpush.bf16.msra.mxu0 %v948
    %1494 = vmatmul.bf16.gmra.mxu0 %v283
    %v1495 = vpop.f32.mrf.mxu0
    %v1496 = vadd.f32 %v1483, %v1495
    %v1497 = vpop.f32.mrf.mxu0
    %1498 = vdwg.mxu0
    %1499 = vmatpush.bf16.msra.mxu0 %v1008
    %1500 = vmatpush.bf16.msra.mxu0 %v1004
    %1501 = vmatpush.bf16.msra.mxu0 %v1000
    %1502 = vmatpush.bf16.msra.mxu0 %v996
    %1503 = vmatpush.bf16.msra.mxu0 %v992
    %1504 = vmatpush.bf16.msra.mxu0 %v988
    %1505 = vmatpush.bf16.msra.mxu0 %v984
    %1506 = vmatpush.bf16.msra.mxu0 %v980
    %1507 = vmatmul.bf16.gmra.mxu0 %v284
    %v1508 = vpop.f32.mrf.mxu0
    %v1509 = vadd.f32 %v1496, %v1508
    %v1510 = vpop.f32.mrf.mxu0
    %1511 = vdwg.mxu0
    %1512 = vmatpush.bf16.msra.mxu0 %v1040
    %1513 = vmatpush.bf16.msra.mxu0 %v1036
    %1514 = vmatpush.bf16.msra.mxu0 %v1032
    %1515 = vmatpush.bf16.msra.mxu0 %v1028
    %1516 = vmatpush.bf16.msra.mxu0 %v1024
    %1517 = vmatpush.bf16.msra.mxu0 %v1020
    %1518 = vmatpush.bf16.msra.mxu0 %v1016
    %1519 = vmatpush.bf16.msra.mxu0 %v1012
    %1520 = vmatmul.bf16.gmra.mxu0 %v285
    %v1521 = vpop.f32.mrf.mxu0
    %v1522 = vadd.f32 %v1509, %v1521
    %v1523 = vpop.f32.mrf.mxu0
    %1524 = vdwg.mxu0
    %1525 = vmatpush.bf16.msra.mxu0 %v1072
    %1526 = vmatpush.bf16.msra.mxu0 %v1068
    %1527 = vmatpush.bf16.msra.mxu0 %v1064
    %1528 = vmatpush.bf16.msra.mxu0 %v1060
    %1529 = vmatpush.bf16.msra.mxu0 %v1056
    %1530 = vmatpush.bf16.msra.mxu0 %v1052
    %1531 = vmatpush.bf16.msra.mxu0 %v1048
    %1532 = vmatpush.bf16.msra.mxu0 %v1044
    %1533 = vmatmul.bf16.gmra.mxu0 %v286
    %v1534 = vpop.f32.mrf.mxu0
    %v1535 = vadd.f32 %v1522, %v1534
    %v1536 = vpop.f32.mrf.mxu0
    %1537 = vdwg.mxu0
    %1538 = vmatpush.bf16.msra.mxu0 0
    %1539 = vmatpush.bf16.msra.mxu0 0
    %1540 = vmatpush.bf16.msra.mxu0 0
    %1541 = vmatpush.bf16.msra.mxu0 0
    %1542 = vmatpush.bf16.msra.mxu0 0
    %1543 = vmatpush.bf16.msra.mxu0 0
    %1544 = vmatpush.bf16.msra.mxu0 0
    %1545 = vmatpush.bf16.msra.mxu0 %v1076
    %1546 = vmatmul.bf16.gmra.mxu0 %v1276
    %v1547 = vpop.f32.mrf.mxu0
    %v1548 = vadd.f32 %v1535, %v1547
    %v1549 = vpop.f32.mrf.mxu0
    %1550 = vdwg.mxu0
    %1551 = vmatpush.bf16.msra.mxu0 %v913
    %1552 = vmatpush.bf16.msra.mxu0 %v909
    %1553 = vmatpush.bf16.msra.mxu0 %v905
    %1554 = vmatpush.bf16.msra.mxu0 %v901
    %1555 = vmatpush.bf16.msra.mxu0 %v897
    %1556 = vmatpush.bf16.msra.mxu0 %v893
    %1557 = vmatpush.bf16.msra.mxu0 %v889
    %1558 = vmatpush.bf16.msra.mxu0 %v885
    %1559 = vmatmul.bf16.gmra.mxu0 %v281
    %v1560 = vpop.f32.mrf.mxu0
    %v1561 = vadd.f32 %v265, %v1560
    %v1562 = vpop.f32.mrf.mxu0
    %1563 = vdwg.mxu0
    %1564 = vmatpush.bf16.msra.mxu0 %v945
    %1565 = vmatpush.bf16.msra.mxu0 %v941
    %1566 = vmatpush.bf16.msra.mxu0 %v937
    %1567 = vmatpush.bf16.msra.mxu0 %v933
    %1568 = vmatpush.bf16.msra.mxu0 %v929
    %1569 = vmatpush.bf16.msra.mxu0 %v925
    %1570 = vmatpush.bf16.msra.mxu0 %v921
    %1571 = vmatpush.bf16.msra.mxu0 %v917
    %1572 = vmatmul.bf16.gmra.mxu0 %v282
    %v1573 = vpop.f32.mrf.mxu0
    %v1574 = vadd.f32 %v1561, %v1573
    %v1575 = vpop.f32.mrf.mxu0
    %1576 = vdwg.mxu0
    %1577 = vmatpush.bf16.msra.mxu0 %v977
    %1578 = vmatpush.bf16.msra.mxu0 %v973
    %1579 = vmatpush.bf16.msra.mxu0 %v969
    %1580 = vmatpush.bf16.msra.mxu0 %v965
    %1581 = vmatpush.bf16.msra.mxu0 %v961
    %1582 = vmatpush.bf16.msra.mxu0 %v957
    %1583 = vmatpush.bf16.msra.mxu0 %v953
    %1584 = vmatpush.bf16.msra.mxu0 %v949
    %1585 = vmatmul.bf16.gmra.mxu0 %v283
    %v1586 = vpop.f32.mrf.mxu0
    %v1587 = vadd.f32 %v1574, %v1586
    %v1588 = vpop.f32.mrf.mxu0
    %1589 = vdwg.mxu0
    %1590 = vmatpush.bf16.msra.mxu0 %v1009
    %1591 = vmatpush.bf16.msra.mxu0 %v1005
    %1592 = vmatpush.bf16.msra.mxu0 %v1001
    %1593 = vmatpush.bf16.msra.mxu0 %v997
    %1594 = vmatpush.bf16.msra.mxu0 %v993
    %1595 = vmatpush.bf16.msra.mxu0 %v989
    %1596 = vmatpush.bf16.msra.mxu0 %v985
    %1597 = vmatpush.bf16.msra.mxu0 %v981
    %1598 = vmatmul.bf16.gmra.mxu0 %v284
    %v1599 = vpop.f32.mrf.mxu0
    %v1600 = vadd.f32 %v1587, %v1599
    %v1601 = vpop.f32.mrf.mxu0
    %1602 = vdwg.mxu0
    %1603 = vmatpush.bf16.msra.mxu0 %v1041
    %1604 = vmatpush.bf16.msra.mxu0 %v1037
    %1605 = vmatpush.bf16.msra.mxu0 %v1033
    %1606 = vmatpush.bf16.msra.mxu0 %v1029
    %1607 = vmatpush.bf16.msra.mxu0 %v1025
    %1608 = vmatpush.bf16.msra.mxu0 %v1021
    %1609 = vmatpush.bf16.msra.mxu0 %v1017
    %1610 = vmatpush.bf16.msra.mxu0 %v1013
    %1611 = vmatmul.bf16.gmra.mxu0 %v285
    %v1612 = vpop.f32.mrf.mxu0
    %v1613 = vadd.f32 %v1600, %v1612
    %v1614 = vpop.f32.mrf.mxu0
    %1615 = vdwg.mxu0
    %1616 = vmatpush.bf16.msra.mxu0 %v1073
    %1617 = vmatpush.bf16.msra.mxu0 %v1069
    %1618 = vmatpush.bf16.msra.mxu0 %v1065
    %1619 = vmatpush.bf16.msra.mxu0 %v1061
    %1620 = vmatpush.bf16.msra.mxu0 %v1057
    %1621 = vmatpush.bf16.msra.mxu0 %v1053
    %1622 = vmatpush.bf16.msra.mxu0 %v1049
    %1623 = vmatpush.bf16.msra.mxu0 %v1045
    %1624 = vmatmul.bf16.gmra.mxu0 %v286
    %v1625 = vpop.f32.mrf.mxu0
    %v1626 = vadd.f32 %v1613, %v1625
    %v1627 = vpop.f32.mrf.mxu0
    %1628 = vdwg.mxu0
    %1629 = vmatpush.bf16.msra.mxu0 0
    %1630 = vmatpush.bf16.msra.mxu0 0
    %1631 = vmatpush.bf16.msra.mxu0 0
    %1632 = vmatpush.bf16.msra.mxu0 0
    %1633 = vmatpush.bf16.msra.mxu0 0
    %1634 = vmatpush.bf16.msra.mxu0 0
    %1635 = vmatpush.bf16.msra.mxu0 0
    %1636 = vmatpush.bf16.msra.mxu0 %v1077
    %1637 = vmatmul.bf16.gmra.mxu0 %v1276
    %v1638 = vpop.f32.mrf.mxu0
    %v1639 = vadd.f32 %v1626, %v1638
    %v1640 = vpop.f32.mrf.mxu0
    %1641 = vdwg.mxu0
    %v1642 = vmax.f32 %v1366, 0.0
    %v1643 = vmax.f32 %v1457, 0.0
    %v1644 = vmax.f32 %v1548, 0.0
    %v1645 = vmax.f32 %v1639, 0.0
    %v1646 = vpack.c.bf16 %v1642, %v1642
    %v1647 = vpack.c.bf16 %v1643, %v1643
    %v1648 = vpack.c.bf16 %v1644, %v1644
    %v1649 = vpack.c.bf16 %v1645, %v1645
    %v1650 = vld [vmem:[#allocation5] sm:$0xff]
    %v1651 = vld [vmem:[#allocation5 + $0x8] sm:$0xff]
    %v1652 = vld [vmem:[#allocation5 + $0x10] sm:$0xff]
    %v1653 = vld [vmem:[#allocation5 + $0x18] sm:$0xff]
    %v1654 = vld [vmem:[#allocation5 + $0x20] sm:$0xff]
    %v1655 = vld [vmem:[#allocation5 + $0x28] sm:$0xff]
    %v1656 = vld [vmem:[#allocation5 + $0x30] sm:$0xff]
    %v1657 = vld [vmem:[#allocation5 + $0x38] sm:$0xff]
    %v1658 = vld [vmem:[#allocation5 + $0x40] sm:$0xff]
    %v1659 = vld [vmem:[#allocation5 + $0x48] sm:$0xff]
    %v1660 = vld [vmem:[#allocation5 + $0x50] sm:$0xff]
    %v1661 = vld [vmem:[#allocation5 + $0x58] sm:$0xff]
    %v1662 = vld [vmem:[#allocation5 + $0x60] sm:$0xff]
    %v1663 = vld [vmem:[#allocation5 + $0x68] sm:$0xff]
    %v1664 = vld [vmem:[#allocation5 + $0x70] sm:$0xff]
    %v1665 = vld [vmem:[#allocation5 + $0x78] sm:$0xff]
    %v1666 = vld [vmem:[#allocation5 + $0x80] sm:$0xff]
    %v1667 = vld [vmem:[#allocation5 + $0x88] sm:$0xff]
    %v1668 = vld [vmem:[#allocation5 + $0x90] sm:$0xff]
    %v1669 = vld [vmem:[#allocation5 + $0x98] sm:$0xff]
    %v1670 = vld [vmem:[#allocation5 + $0xa0] sm:$0xff]
    %v1671 = vld [vmem:[#allocation5 + $0xa8] sm:$0xff]
    %v1672 = vld [vmem:[#allocation5 + $0xb0] sm:$0xff]
    %v1673 = vld [vmem:[#allocation5 + $0xb8] sm:$0xff]
    %v1674 = vld [vmem:[#allocation5 + $0xc0] sm:$0xff]
    %v1675 = vld [vmem:[#allocation5 + $0xc8] sm:$0xff]
    %v1676 = vld [vmem:[#allocation5 + $0xd0] sm:$0xff]
    %v1677 = vld [vmem:[#allocation5 + $0xd8] sm:$0xff]
    %v1678 = vld [vmem:[#allocation5 + $0xe0] sm:$0xff]
    %v1679 = vld [vmem:[#allocation5 + $0xe8] sm:$0xff]
    %v1680 = vld [vmem:[#allocation5 + $0xf0] sm:$0xff]
    %v1681 = vld [vmem:[#allocation5 + $0xf8] sm:$0xff]
    %v1682 = vld [vmem:[#allocation5 + $0x100] sm:$0xff]
    %v1683 = vld [vmem:[#allocation5 + $0x108] sm:$0xff]
    %v1684 = vld [vmem:[#allocation5 + $0x110] sm:$0xff]
    %v1685 = vld [vmem:[#allocation5 + $0x118] sm:$0xff]
    %v1686 = vld [vmem:[#allocation5 + $0x120] sm:$0xff]
    %v1687 = vld [vmem:[#allocation5 + $0x128] sm:$0xff]
    %v1688 = vld [vmem:[#allocation5 + $0x130] sm:$0xff]
    %v1689 = vld [vmem:[#allocation5 + $0x138] sm:$0xff]
    %v1690 = vld [vmem:[#allocation5 + $0x140] sm:$0xff]
    %v1691 = vld [vmem:[#allocation5 + $0x148] sm:$0xff]
    %v1692 = vld [vmem:[#allocation5 + $0x150] sm:$0xff]
    %v1693 = vld [vmem:[#allocation5 + $0x158] sm:$0xff]
    %v1694 = vld [vmem:[#allocation5 + $0x160] sm:$0xff]
    %v1695 = vld [vmem:[#allocation5 + $0x168] sm:$0xff]
    %v1696 = vld [vmem:[#allocation5 + $0x170] sm:$0xff]
    %v1697 = vld [vmem:[#allocation5 + $0x178] sm:$0xff]
    %v1698 = vld [vmem:[#allocation5 + $0x180] sm:$0xff]
    %v1699 = vld [vmem:[#allocation5 + $0x188] sm:$0xff]
    %v1700 = vld [vmem:[#allocation5 + $0x190] sm:$0xff]
    %v1701 = vld [vmem:[#allocation5 + $0x198] sm:$0xff]
    %v1702 = vld [vmem:[#allocation5 + $0x1a0] sm:$0xff]
    %v1703 = vld [vmem:[#allocation5 + $0x1a8] sm:$0xff]
    %v1704 = vld [vmem:[#allocation5 + $0x1b0] sm:$0xff]
    %v1705 = vld [vmem:[#allocation5 + $0x1b8] sm:$0xff]
    %v1706 = vld [vmem:[#allocation5 + $0x1c0] sm:$0xff]
    %v1707 = vld [vmem:[#allocation5 + $0x1c8] sm:$0xff]
    %v1708 = vld [vmem:[#allocation5 + $0x1d0] sm:$0xff]
    %v1709 = vld [vmem:[#allocation5 + $0x1d8] sm:$0xff]
    %v1710 = vld [vmem:[#allocation5 + $0x1e0] sm:$0xff]
    %v1711 = vld [vmem:[#allocation5 + $0x1e8] sm:$0xff]
    %v1712 = vld [vmem:[#allocation5 + $0x1f0] sm:$0xff]
    %v1713 = vld [vmem:[#allocation5 + $0x1f8] sm:$0xff]
    %v1714 = vld [vmem:[#allocation5 + $0x200] sm:$0xff]
    %v1715 = vld [vmem:[#allocation5 + $0x208] sm:$0xff]
    %v1716 = vld [vmem:[#allocation5 + $0x210] sm:$0xff]
    %v1717 = vld [vmem:[#allocation5 + $0x218] sm:$0xff]
    %v1718 = vld [vmem:[#allocation5 + $0x220] sm:$0xff]
    %v1719 = vld [vmem:[#allocation5 + $0x228] sm:$0xff]
    %v1720 = vld [vmem:[#allocation5 + $0x230] sm:$0xff]
    %v1721 = vld [vmem:[#allocation5 + $0x238] sm:$0xff]
    %v1722 = vld [vmem:[#allocation5 + $0x240] sm:$0xff]
    %v1723 = vld [vmem:[#allocation5 + $0x248] sm:$0xff]
    %v1724 = vld [vmem:[#allocation5 + $0x250] sm:$0xff]
    %v1725 = vld [vmem:[#allocation5 + $0x258] sm:$0xff]
    %v1726 = vld [vmem:[#allocation5 + $0x260] sm:$0xff]
    %v1727 = vld [vmem:[#allocation5 + $0x268] sm:$0xff]
    %v1728 = vld [vmem:[#allocation5 + $0x270] sm:$0xff]
    %v1729 = vld [vmem:[#allocation5 + $0x278] sm:$0xff]
    %v1730 = vld [vmem:[#allocation5 + $0x280] sm:$0xff]
    %v1731 = vld [vmem:[#allocation5 + $0x288] sm:$0xff]
    %v1732 = vld [vmem:[#allocation5 + $0x290] sm:$0xff]
    %v1733 = vld [vmem:[#allocation5 + $0x298] sm:$0xff]
    %v1734 = vld [vmem:[#allocation5 + $0x2a0] sm:$0xff]
    %v1735 = vld [vmem:[#allocation5 + $0x2a8] sm:$0xff]
    %v1736 = vld [vmem:[#allocation5 + $0x2b0] sm:$0xff]
    %v1737 = vld [vmem:[#allocation5 + $0x2b8] sm:$0xff]
    %v1738 = vld [vmem:[#allocation5 + $0x2c0] sm:$0xff]
    %v1739 = vld [vmem:[#allocation5 + $0x2c8] sm:$0xff]
    %v1740 = vld [vmem:[#allocation5 + $0x2d0] sm:$0xff]
    %v1741 = vld [vmem:[#allocation5 + $0x2d8] sm:$0xff]
    %v1742 = vld [vmem:[#allocation5 + $0x2e0] sm:$0xff]
    %v1743 = vld [vmem:[#allocation5 + $0x2e8] sm:$0xff]
    %v1744 = vld [vmem:[#allocation5 + $0x2f0] sm:$0xff]
    %v1745 = vld [vmem:[#allocation5 + $0x2f8] sm:$0xff]
    %v1746 = vld [vmem:[#allocation5 + $0x300] sm:$0xff]
    %v1747 = vld [vmem:[#allocation5 + $0x308] sm:$0xff]
    %v1748 = vld [vmem:[#allocation5 + $0x310] sm:$0xff]
    %v1749 = vld [vmem:[#allocation5 + $0x318] sm:$0xff]
    %v1750 = vld [vmem:[#allocation5 + $0x320] sm:$0xff]
    %v1751 = vld [vmem:[#allocation5 + $0x328] sm:$0xff]
    %v1752 = vld [vmem:[#allocation5 + $0x330] sm:$0xff]
    %v1753 = vld [vmem:[#allocation5 + $0x338] sm:$0xff]
    %v1754 = vld [vmem:[#allocation5 + $0x340] sm:$0xff]
    %v1755 = vld [vmem:[#allocation5 + $0x348] sm:$0xff]
    %v1756 = vld [vmem:[#allocation5 + $0x350] sm:$0xff]
    %v1757 = vld [vmem:[#allocation5 + $0x358] sm:$0xff]
    %v1758 = vld [vmem:[#allocation5 + $0x360] sm:$0xff]
    %v1759 = vld [vmem:[#allocation5 + $0x368] sm:$0xff]
    %v1760 = vld [vmem:[#allocation5 + $0x370] sm:$0xff]
    %v1761 = vld [vmem:[#allocation5 + $0x378] sm:$0xff]
    %v1762 = vld [vmem:[#allocation5 + $0x380] sm:$0xff]
    %v1763 = vld [vmem:[#allocation5 + $0x388] sm:$0xff]
    %v1764 = vld [vmem:[#allocation5 + $0x390] sm:$0xff]
    %v1765 = vld [vmem:[#allocation5 + $0x398] sm:$0xff]
    %v1766 = vld [vmem:[#allocation5 + $0x3a0] sm:$0xff]
    %v1767 = vld [vmem:[#allocation5 + $0x3a8] sm:$0xff]
    %v1768 = vld [vmem:[#allocation5 + $0x3b0] sm:$0xff]
    %v1769 = vld [vmem:[#allocation5 + $0x3b8] sm:$0xff]
    %v1770 = vld [vmem:[#allocation5 + $0x3c0] sm:$0xff]
    %v1771 = vld [vmem:[#allocation5 + $0x3c8] sm:$0xff]
    %v1772 = vld [vmem:[#allocation5 + $0x3d0] sm:$0xff]
    %v1773 = vld [vmem:[#allocation5 + $0x3d8] sm:$0xff]
    %v1774 = vld [vmem:[#allocation5 + $0x3e0] sm:$0xff]
    %v1775 = vld [vmem:[#allocation5 + $0x3e8] sm:$0xff]
    %v1776 = vld [vmem:[#allocation5 + $0x3f0] sm:$0xff]
    %v1777 = vld [vmem:[#allocation5 + $0x3f8] sm:$0xff]
    %v1778 = vld [vmem:[%s4] sm:$0xf]
    %v1780 = vperm.slane %v1778, 0
    %v1781 = vperm.slane %v1778, 1
    %v1782 = vperm.slane %v1778, 2
    %v1783 = vperm.slane %v1778, 3
    %v1916 = vunpack.c.l.b16 %v1650
    %v1917 = vunpack.c.h.b16 %v1650
    %v1918 = vunpack.c.l.b16 %v1651
    %v1919 = vunpack.c.h.b16 %v1651
    %v1920 = vunpack.c.l.b16 %v1652
    %v1921 = vunpack.c.h.b16 %v1652
    %v1922 = vunpack.c.l.b16 %v1653
    %v1923 = vunpack.c.h.b16 %v1653
    %v1924 = vunpack.c.l.b16 %v1654
    %v1925 = vunpack.c.h.b16 %v1654
    %v1926 = vunpack.c.l.b16 %v1655
    %v1927 = vunpack.c.h.b16 %v1655
    %v1928 = vunpack.c.l.b16 %v1656
    %v1929 = vunpack.c.h.b16 %v1656
    %v1930 = vunpack.c.l.b16 %v1657
    %v1931 = vunpack.c.h.b16 %v1657
    %v1932 = vunpack.c.l.b16 %v1658
    %v1933 = vunpack.c.h.b16 %v1658
    %v1934 = vunpack.c.l.b16 %v1659
    %v1935 = vunpack.c.h.b16 %v1659
    %v1936 = vunpack.c.l.b16 %v1660
    %v1937 = vunpack.c.h.b16 %v1660
    %v1938 = vunpack.c.l.b16 %v1661
    %v1939 = vunpack.c.h.b16 %v1661
    %v1940 = vunpack.c.l.b16 %v1662
    %v1941 = vunpack.c.h.b16 %v1662
    %v1942 = vunpack.c.l.b16 %v1663
    %v1943 = vunpack.c.h.b16 %v1663
    %v1944 = vunpack.c.l.b16 %v1664
    %v1945 = vunpack.c.h.b16 %v1664
    %v1946 = vunpack.c.l.b16 %v1665
    %v1947 = vunpack.c.h.b16 %v1665
    %v1948 = vunpack.c.l.b16 %v1666
    %v1949 = vunpack.c.h.b16 %v1666
    %v1950 = vunpack.c.l.b16 %v1667
    %v1951 = vunpack.c.h.b16 %v1667
    %v1952 = vunpack.c.l.b16 %v1668
    %v1953 = vunpack.c.h.b16 %v1668
    %v1954 = vunpack.c.l.b16 %v1669
    %v1955 = vunpack.c.h.b16 %v1669
    %v1956 = vunpack.c.l.b16 %v1670
    %v1957 = vunpack.c.h.b16 %v1670
    %v1958 = vunpack.c.l.b16 %v1671
    %v1959 = vunpack.c.h.b16 %v1671
    %v1960 = vunpack.c.l.b16 %v1672
    %v1961 = vunpack.c.h.b16 %v1672
    %v1962 = vunpack.c.l.b16 %v1673
    %v1963 = vunpack.c.h.b16 %v1673
    %v1964 = vunpack.c.l.b16 %v1674
    %v1965 = vunpack.c.h.b16 %v1674
    %v1966 = vunpack.c.l.b16 %v1675
    %v1967 = vunpack.c.h.b16 %v1675
    %v1968 = vunpack.c.l.b16 %v1676
    %v1969 = vunpack.c.h.b16 %v1676
    %v1970 = vunpack.c.l.b16 %v1677
    %v1971 = vunpack.c.h.b16 %v1677
    %v1972 = vunpack.c.l.b16 %v1678
    %v1973 = vunpack.c.h.b16 %v1678
    %v1974 = vunpack.c.l.b16 %v1679
    %v1975 = vunpack.c.h.b16 %v1679
    %v1976 = vunpack.c.l.b16 %v1680
    %v1977 = vunpack.c.h.b16 %v1680
    %v1978 = vunpack.c.l.b16 %v1681
    %v1979 = vunpack.c.h.b16 %v1681
    %v1980 = vunpack.c.l.b16 %v1682
    %v1981 = vunpack.c.h.b16 %v1682
    %v1982 = vunpack.c.l.b16 %v1683
    %v1983 = vunpack.c.h.b16 %v1683
    %v1984 = vunpack.c.l.b16 %v1684
    %v1985 = vunpack.c.h.b16 %v1684
    %v1986 = vunpack.c.l.b16 %v1685
    %v1987 = vunpack.c.h.b16 %v1685
    %v1988 = vunpack.c.l.b16 %v1686
    %v1989 = vunpack.c.h.b16 %v1686
    %v1990 = vunpack.c.l.b16 %v1687
    %v1991 = vunpack.c.h.b16 %v1687
    %v1992 = vunpack.c.l.b16 %v1688
    %v1993 = vunpack.c.h.b16 %v1688
    %v1994 = vunpack.c.l.b16 %v1689
    %v1995 = vunpack.c.h.b16 %v1689
    %v1996 = vunpack.c.l.b16 %v1690
    %v1997 = vunpack.c.h.b16 %v1690
    %v1998 = vunpack.c.l.b16 %v1691
    %v1999 = vunpack.c.h.b16 %v1691
    %v2000 = vunpack.c.l.b16 %v1692
    %v2001 = vunpack.c.h.b16 %v1692
    %v2002 = vunpack.c.l.b16 %v1693
    %v2003 = vunpack.c.h.b16 %v1693
    %v2004 = vunpack.c.l.b16 %v1694
    %v2005 = vunpack.c.h.b16 %v1694
    %v2006 = vunpack.c.l.b16 %v1695
    %v2007 = vunpack.c.h.b16 %v1695
    %v2008 = vunpack.c.l.b16 %v1696
    %v2009 = vunpack.c.h.b16 %v1696
    %v2010 = vunpack.c.l.b16 %v1697
    %v2011 = vunpack.c.h.b16 %v1697
    %v2012 = vunpack.c.l.b16 %v1698
    %v2013 = vunpack.c.h.b16 %v1698
    %v2014 = vunpack.c.l.b16 %v1699
    %v2015 = vunpack.c.h.b16 %v1699
    %v2016 = vunpack.c.l.b16 %v1700
    %v2017 = vunpack.c.h.b16 %v1700
    %v2018 = vunpack.c.l.b16 %v1701
    %v2019 = vunpack.c.h.b16 %v1701
    %v2020 = vunpack.c.l.b16 %v1702
    %v2021 = vunpack.c.h.b16 %v1702
    %v2022 = vunpack.c.l.b16 %v1703
    %v2023 = vunpack.c.h.b16 %v1703
    %v2024 = vunpack.c.l.b16 %v1704
    %v2025 = vunpack.c.h.b16 %v1704
    %v2026 = vunpack.c.l.b16 %v1705
    %v2027 = vunpack.c.h.b16 %v1705
    %v2028 = vunpack.c.l.b16 %v1706
    %v2029 = vunpack.c.h.b16 %v1706
    %v2030 = vunpack.c.l.b16 %v1707
    %v2031 = vunpack.c.h.b16 %v1707
    %v2032 = vunpack.c.l.b16 %v1708
    %v2033 = vunpack.c.h.b16 %v1708
    %v2034 = vunpack.c.l.b16 %v1709
    %v2035 = vunpack.c.h.b16 %v1709
    %v2036 = vunpack.c.l.b16 %v1710
    %v2037 = vunpack.c.h.b16 %v1710
    %v2038 = vunpack.c.l.b16 %v1711
    %v2039 = vunpack.c.h.b16 %v1711
    %v2040 = vunpack.c.l.b16 %v1712
    %v2041 = vunpack.c.h.b16 %v1712
    %v2042 = vunpack.c.l.b16 %v1713
    %v2043 = vunpack.c.h.b16 %v1713
    %v2044 = vunpack.c.l.b16 %v1714
    %v2045 = vunpack.c.h.b16 %v1714
    %v2046 = vunpack.c.l.b16 %v1715
    %v2047 = vunpack.c.h.b16 %v1715
    %v2048 = vunpack.c.l.b16 %v1716
    %v2049 = vunpack.c.h.b16 %v1716
    %v2050 = vunpack.c.l.b16 %v1717
    %v2051 = vunpack.c.h.b16 %v1717
    %v2052 = vunpack.c.l.b16 %v1718
    %v2053 = vunpack.c.h.b16 %v1718
    %v2054 = vunpack.c.l.b16 %v1719
    %v2055 = vunpack.c.h.b16 %v1719
    %v2056 = vunpack.c.l.b16 %v1720
    %v2057 = vunpack.c.h.b16 %v1720
    %v2058 = vunpack.c.l.b16 %v1721
    %v2059 = vunpack.c.h.b16 %v1721
    %v2060 = vunpack.c.l.b16 %v1722
    %v2061 = vunpack.c.h.b16 %v1722
    %v2062 = vunpack.c.l.b16 %v1723
    %v2063 = vunpack.c.h.b16 %v1723
    %v2064 = vunpack.c.l.b16 %v1724
    %v2065 = vunpack.c.h.b16 %v1724
    %v2066 = vunpack.c.l.b16 %v1725
    %v2067 = vunpack.c.h.b16 %v1725
    %v2068 = vunpack.c.l.b16 %v1726
    %v2069 = vunpack.c.h.b16 %v1726
    %v2070 = vunpack.c.l.b16 %v1727
    %v2071 = vunpack.c.h.b16 %v1727
    %v2072 = vunpack.c.l.b16 %v1728
    %v2073 = vunpack.c.h.b16 %v1728
    %v2074 = vunpack.c.l.b16 %v1729
    %v2075 = vunpack.c.h.b16 %v1729
    %v2076 = vunpack.c.l.b16 %v1730
    %v2077 = vunpack.c.h.b16 %v1730
    %v2078 = vunpack.c.l.b16 %v1731
    %v2079 = vunpack.c.h.b16 %v1731
    %v2080 = vunpack.c.l.b16 %v1732
    %v2081 = vunpack.c.h.b16 %v1732
    %v2082 = vunpack.c.l.b16 %v1733
    %v2083 = vunpack.c.h.b16 %v1733
    %v2084 = vunpack.c.l.b16 %v1734
    %v2085 = vunpack.c.h.b16 %v1734
    %v2086 = vunpack.c.l.b16 %v1735
    %v2087 = vunpack.c.h.b16 %v1735
    %v2088 = vunpack.c.l.b16 %v1736
    %v2089 = vunpack.c.h.b16 %v1736
    %v2090 = vunpack.c.l.b16 %v1737
    %v2091 = vunpack.c.h.b16 %v1737
    %v2092 = vunpack.c.l.b16 %v1738
    %v2093 = vunpack.c.h.b16 %v1738
    %v2094 = vunpack.c.l.b16 %v1739
    %v2095 = vunpack.c.h.b16 %v1739
    %v2096 = vunpack.c.l.b16 %v1740
    %v2097 = vunpack.c.h.b16 %v1740
    %v2098 = vunpack.c.l.b16 %v1741
    %v2099 = vunpack.c.h.b16 %v1741
    %v2100 = vunpack.c.l.b16 %v1742
    %v2101 = vunpack.c.h.b16 %v1742
    %v2102 = vunpack.c.l.b16 %v1743
    %v2103 = vunpack.c.h.b16 %v1743
    %v2104 = vunpack.c.l.b16 %v1744
    %v2105 = vunpack.c.h.b16 %v1744
    %v2106 = vunpack.c.l.b16 %v1745
    %v2107 = vunpack.c.h.b16 %v1745
    %v2108 = vunpack.c.l.b16 %v1746
    %v2109 = vunpack.c.h.b16 %v1746
    %v2110 = vunpack.c.l.b16 %v1747
    %v2111 = vunpack.c.h.b16 %v1747
    %v2112 = vunpack.c.l.b16 %v1748
    %v2113 = vunpack.c.h.b16 %v1748
    %v2114 = vunpack.c.l.b16 %v1749
    %v2115 = vunpack.c.h.b16 %v1749
    %v2116 = vunpack.c.l.b16 %v1750
    %v2117 = vunpack.c.h.b16 %v1750
    %v2118 = vunpack.c.l.b16 %v1751
    %v2119 = vunpack.c.h.b16 %v1751
    %v2120 = vunpack.c.l.b16 %v1752
    %v2121 = vunpack.c.h.b16 %v1752
    %v2122 = vunpack.c.l.b16 %v1753
    %v2123 = vunpack.c.h.b16 %v1753
    %v2124 = vunpack.c.l.b16 %v1754
    %v2125 = vunpack.c.h.b16 %v1754
    %v2126 = vunpack.c.l.b16 %v1755
    %v2127 = vunpack.c.h.b16 %v1755
    %v2128 = vunpack.c.l.b16 %v1756
    %v2129 = vunpack.c.h.b16 %v1756
    %v2130 = vunpack.c.l.b16 %v1757
    %v2131 = vunpack.c.h.b16 %v1757
    %v2132 = vunpack.c.l.b16 %v1758
    %v2133 = vunpack.c.h.b16 %v1758
    %v2134 = vunpack.c.l.b16 %v1759
    %v2135 = vunpack.c.h.b16 %v1759
    %v2136 = vunpack.c.l.b16 %v1760
    %v2137 = vunpack.c.h.b16 %v1760
    %v2138 = vunpack.c.l.b16 %v1761
    %v2139 = vunpack.c.h.b16 %v1761
    %v2140 = vunpack.c.l.b16 %v1762
    %v2141 = vunpack.c.h.b16 %v1762
    %v2142 = vunpack.c.l.b16 %v1763
    %v2143 = vunpack.c.h.b16 %v1763
    %v2144 = vunpack.c.l.b16 %v1764
    %v2145 = vunpack.c.h.b16 %v1764
    %v2146 = vunpack.c.l.b16 %v1765
    %v2147 = vunpack.c.h.b16 %v1765
    %v2148 = vunpack.c.l.b16 %v1766
    %v2149 = vunpack.c.h.b16 %v1766
    %v2150 = vunpack.c.l.b16 %v1767
    %v2151 = vunpack.c.h.b16 %v1767
    %v2152 = vunpack.c.l.b16 %v1768
    %v2153 = vunpack.c.h.b16 %v1768
    %v2154 = vunpack.c.l.b16 %v1769
    %v2155 = vunpack.c.h.b16 %v1769
    %v2156 = vunpack.c.l.b16 %v1770
    %v2157 = vunpack.c.h.b16 %v1770
    %v2158 = vunpack.c.l.b16 %v1771
    %v2159 = vunpack.c.h.b16 %v1771
    %v2160 = vunpack.c.l.b16 %v1772
    %v2161 = vunpack.c.h.b16 %v1772
    %v2162 = vunpack.c.l.b16 %v1773
    %v2163 = vunpack.c.h.b16 %v1773
    %v2164 = vunpack.c.l.b16 %v1774
    %v2165 = vunpack.c.h.b16 %v1774
    %v2166 = vunpack.c.l.b16 %v1775
    %v2167 = vunpack.c.h.b16 %v1775
    %v2168 = vunpack.c.l.b16 %v1776
    %v2169 = vunpack.c.h.b16 %v1776
    %v2170 = vunpack.c.l.b16 %v1777
    %v2171 = vunpack.c.h.b16 %v1777
    %v2172 = vpack.c.b16 %v1920, %v1916
    %v2173 = vpack.c.b16 %v1921, %v1917
    %v2174 = vpack.c.b16 %v1922, %v1918
    %v2175 = vpack.c.b16 %v1923, %v1919
    %v2176 = vpack.c.b16 %v1928, %v1924
    %v2177 = vpack.c.b16 %v1929, %v1925
    %v2178 = vpack.c.b16 %v1930, %v1926
    %v2179 = vpack.c.b16 %v1931, %v1927
    %v2180 = vpack.c.b16 %v1936, %v1932
    %v2181 = vpack.c.b16 %v1937, %v1933
    %v2182 = vpack.c.b16 %v1938, %v1934
    %v2183 = vpack.c.b16 %v1939, %v1935
    %v2184 = vpack.c.b16 %v1944, %v1940
    %v2185 = vpack.c.b16 %v1945, %v1941
    %v2186 = vpack.c.b16 %v1946, %v1942
    %v2187 = vpack.c.b16 %v1947, %v1943
    %v2188 = vpack.c.b16 %v1952, %v1948
    %v2189 = vpack.c.b16 %v1953, %v1949
    %v2190 = vpack.c.b16 %v1954, %v1950
    %v2191 = vpack.c.b16 %v1955, %v1951
    %v2192 = vpack.c.b16 %v1960, %v1956
    %v2193 = vpack.c.b16 %v1961, %v1957
    %v2194 = vpack.c.b16 %v1962, %v1958
    %v2195 = vpack.c.b16 %v1963, %v1959
    %v2196 = vpack.c.b16 %v1968, %v1964
    %v2197 = vpack.c.b16 %v1969, %v1965
    %v2198 = vpack.c.b16 %v1970, %v1966
    %v2199 = vpack.c.b16 %v1971, %v1967
    %v2200 = vpack.c.b16 %v1976, %v1972
    %v2201 = vpack.c.b16 %v1977, %v1973
    %v2202 = vpack.c.b16 %v1978, %v1974
    %v2203 = vpack.c.b16 %v1979, %v1975
    %v2204 = vpack.c.b16 %v1984, %v1980
    %v2205 = vpack.c.b16 %v1985, %v1981
    %v2206 = vpack.c.b16 %v1986, %v1982
    %v2207 = vpack.c.b16 %v1987, %v1983
    %v2208 = vpack.c.b16 %v1992, %v1988
    %v2209 = vpack.c.b16 %v1993, %v1989
    %v2210 = vpack.c.b16 %v1994, %v1990
    %v2211 = vpack.c.b16 %v1995, %v1991
    %v2212 = vpack.c.b16 %v2000, %v1996
    %v2213 = vpack.c.b16 %v2001, %v1997
    %v2214 = vpack.c.b16 %v2002, %v1998
    %v2215 = vpack.c.b16 %v2003, %v1999
    %v2216 = vpack.c.b16 %v2008, %v2004
    %v2217 = vpack.c.b16 %v2009, %v2005
    %v2218 = vpack.c.b16 %v2010, %v2006
    %v2219 = vpack.c.b16 %v2011, %v2007
    %v2220 = vpack.c.b16 %v2016, %v2012
    %v2221 = vpack.c.b16 %v2017, %v2013
    %v2222 = vpack.c.b16 %v2018, %v2014
    %v2223 = vpack.c.b16 %v2019, %v2015
    %v2224 = vpack.c.b16 %v2024, %v2020
    %v2225 = vpack.c.b16 %v2025, %v2021
    %v2226 = vpack.c.b16 %v2026, %v2022
    %v2227 = vpack.c.b16 %v2027, %v2023
    %v2228 = vpack.c.b16 %v2032, %v2028
    %v2229 = vpack.c.b16 %v2033, %v2029
    %v2230 = vpack.c.b16 %v2034, %v2030
    %v2231 = vpack.c.b16 %v2035, %v2031
    %v2232 = vpack.c.b16 %v2040, %v2036
    %v2233 = vpack.c.b16 %v2041, %v2037
    %v2234 = vpack.c.b16 %v2042, %v2038
    %v2235 = vpack.c.b16 %v2043, %v2039
    %v2236 = vpack.c.b16 %v2048, %v2044
    %v2237 = vpack.c.b16 %v2049, %v2045
    %v2238 = vpack.c.b16 %v2050, %v2046
    %v2239 = vpack.c.b16 %v2051, %v2047
    %v2240 = vpack.c.b16 %v2056, %v2052
    %v2241 = vpack.c.b16 %v2057, %v2053
    %v2242 = vpack.c.b16 %v2058, %v2054
    %v2243 = vpack.c.b16 %v2059, %v2055
    %v2244 = vpack.c.b16 %v2064, %v2060
    %v2245 = vpack.c.b16 %v2065, %v2061
    %v2246 = vpack.c.b16 %v2066, %v2062
    %v2247 = vpack.c.b16 %v2067, %v2063
    %v2248 = vpack.c.b16 %v2072, %v2068
    %v2249 = vpack.c.b16 %v2073, %v2069
    %v2250 = vpack.c.b16 %v2074, %v2070
    %v2251 = vpack.c.b16 %v2075, %v2071
    %v2252 = vpack.c.b16 %v2080, %v2076
    %v2253 = vpack.c.b16 %v2081, %v2077
    %v2254 = vpack.c.b16 %v2082, %v2078
    %v2255 = vpack.c.b16 %v2083, %v2079
    %v2256 = vpack.c.b16 %v2088, %v2084
    %v2257 = vpack.c.b16 %v2089, %v2085
    %v2258 = vpack.c.b16 %v2090, %v2086
    %v2259 = vpack.c.b16 %v2091, %v2087
    %v2260 = vpack.c.b16 %v2096, %v2092
    %v2261 = vpack.c.b16 %v2097, %v2093
    %v2262 = vpack.c.b16 %v2098, %v2094
    %v2263 = vpack.c.b16 %v2099, %v2095
    %v2264 = vpack.c.b16 %v2104, %v2100
    %v2265 = vpack.c.b16 %v2105, %v2101
    %v2266 = vpack.c.b16 %v2106, %v2102
    %v2267 = vpack.c.b16 %v2107, %v2103
    %v2268 = vpack.c.b16 %v2112, %v2108
    %v2269 = vpack.c.b16 %v2113, %v2109
    %v2270 = vpack.c.b16 %v2114, %v2110
    %v2271 = vpack.c.b16 %v2115, %v2111
    %v2272 = vpack.c.b16 %v2120, %v2116
    %v2273 = vpack.c.b16 %v2121, %v2117
    %v2274 = vpack.c.b16 %v2122, %v2118
    %v2275 = vpack.c.b16 %v2123, %v2119
    %v2276 = vpack.c.b16 %v2128, %v2124
    %v2277 = vpack.c.b16 %v2129, %v2125
    %v2278 = vpack.c.b16 %v2130, %v2126
    %v2279 = vpack.c.b16 %v2131, %v2127
    %v2280 = vpack.c.b16 %v2136, %v2132
    %v2281 = vpack.c.b16 %v2137, %v2133
    %v2282 = vpack.c.b16 %v2138, %v2134
    %v2283 = vpack.c.b16 %v2139, %v2135
    %v2284 = vpack.c.b16 %v2144, %v2140
    %v2285 = vpack.c.b16 %v2145, %v2141
    %v2286 = vpack.c.b16 %v2146, %v2142
    %v2287 = vpack.c.b16 %v2147, %v2143
    %v2288 = vpack.c.b16 %v2152, %v2148
    %v2289 = vpack.c.b16 %v2153, %v2149
    %v2290 = vpack.c.b16 %v2154, %v2150
    %v2291 = vpack.c.b16 %v2155, %v2151
    %v2292 = vpack.c.b16 %v2160, %v2156
    %v2293 = vpack.c.b16 %v2161, %v2157
    %v2294 = vpack.c.b16 %v2162, %v2158
    %v2295 = vpack.c.b16 %v2163, %v2159
    %v2296 = vpack.c.b16 %v2168, %v2164
    %v2297 = vpack.c.b16 %v2169, %v2165
    %v2298 = vpack.c.b16 %v2170, %v2166
    %v2299 = vpack.c.b16 %v2171, %v2167
    %2428 = vmatpush.bf16.msra.mxu0 %v2200
    %2429 = vmatpush.bf16.msra.mxu0 %v2196
    %2430 = vmatpush.bf16.msra.mxu0 %v2192
    %2431 = vmatpush.bf16.msra.mxu0 %v2188
    %2432 = vmatpush.bf16.msra.mxu0 %v2184
    %2433 = vmatpush.bf16.msra.mxu0 %v2180
    %2434 = vmatpush.bf16.msra.mxu0 %v2176
    %2435 = vmatpush.bf16.msra.mxu0 %v2172
    %2436 = vmatmul.bf16.gmra.mxu0 %v1646
    %v2437 = vpop.f32.mrf.mxu0
    %v2438 = vadd.f32 %v1780, %v2437
    %v2439 = vpop.f32.mrf.mxu0
    %2440 = vdwg.mxu0
    %2441 = vmatpush.bf16.msra.mxu0 %v2232
    %2442 = vmatpush.bf16.msra.mxu0 %v2228
    %2443 = vmatpush.bf16.msra.mxu0 %v2224
    %2444 = vmatpush.bf16.msra.mxu0 %v2220
    %2445 = vmatpush.bf16.msra.mxu0 %v2216
    %2446 = vmatpush.bf16.msra.mxu0 %v2212
    %2447 = vmatpush.bf16.msra.mxu0 %v2208
    %2448 = vmatpush.bf16.msra.mxu0 %v2204
    %2449 = vmatmul.bf16.gmra.mxu0 %v1647
    %v2450 = vpop.f32.mrf.mxu0
    %v2451 = vadd.f32 %v2438, %v2450
    %v2452 = vpop.f32.mrf.mxu0
    %2453 = vdwg.mxu0
    %2454 = vmatpush.bf16.msra.mxu0 %v2264
    %2455 = vmatpush.bf16.msra.mxu0 %v2260
    %2456 = vmatpush.bf16.msra.mxu0 %v2256
    %2457 = vmatpush.bf16.msra.mxu0 %v2252
    %2458 = vmatpush.bf16.msra.mxu0 %v2248
    %2459 = vmatpush.bf16.msra.mxu0 %v2244
    %2460 = vmatpush.bf16.msra.mxu0 %v2240
    %2461 = vmatpush.bf16.msra.mxu0 %v2236
    %2462 = vmatmul.bf16.gmra.mxu0 %v1648
    %v2463 = vpop.f32.mrf.mxu0
    %v2464 = vadd.f32 %v2451, %v2463
    %v2465 = vpop.f32.mrf.mxu0
    %2466 = vdwg.mxu0
    %2467 = vmatpush.bf16.msra.mxu0 %v2296
    %2468 = vmatpush.bf16.msra.mxu0 %v2292
    %2469 = vmatpush.bf16.msra.mxu0 %v2288
    %2470 = vmatpush.bf16.msra.mxu0 %v2284
    %2471 = vmatpush.bf16.msra.mxu0 %v2280
    %2472 = vmatpush.bf16.msra.mxu0 %v2276
    %2473 = vmatpush.bf16.msra.mxu0 %v2272
    %2474 = vmatpush.bf16.msra.mxu0 %v2268
    %2475 = vmatmul.bf16.gmra.mxu0 %v1649
    %v2476 = vpop.f32.mrf.mxu0
    %v2477 = vadd.f32 %v2464, %v2476
    %v2478 = vpop.f32.mrf.mxu0
    %2479 = vdwg.mxu0
    %2480 = vmatpush.bf16.msra.mxu0 %v2201
    %2481 = vmatpush.bf16.msra.mxu0 %v2197
    %2482 = vmatpush.bf16.msra.mxu0 %v2193
    %2483 = vmatpush.bf16.msra.mxu0 %v2189
    %2484 = vmatpush.bf16.msra.mxu0 %v2185
    %2485 = vmatpush.bf16.msra.mxu0 %v2181
    %2486 = vmatpush.bf16.msra.mxu0 %v2177
    %2487 = vmatpush.bf16.msra.mxu0 %v2173
    %2488 = vmatmul.bf16.gmra.mxu0 %v1646
    %v2489 = vpop.f32.mrf.mxu0
    %v2490 = vadd.f32 %v1781, %v2489
    %v2491 = vpop.f32.mrf.mxu0
    %2492 = vdwg.mxu0
    %2493 = vmatpush.bf16.msra.mxu0 %v2233
    %2494 = vmatpush.bf16.msra.mxu0 %v2229
    %2495 = vmatpush.bf16.msra.mxu0 %v2225
    %2496 = vmatpush.bf16.msra.mxu0 %v2221
    %2497 = vmatpush.bf16.msra.mxu0 %v2217
    %2498 = vmatpush.bf16.msra.mxu0 %v2213
    %2499 = vmatpush.bf16.msra.mxu0 %v2209
    %2500 = vmatpush.bf16.msra.mxu0 %v2205
    %2501 = vmatmul.bf16.gmra.mxu0 %v1647
    %v2502 = vpop.f32.mrf.mxu0
    %v2503 = vadd.f32 %v2490, %v2502
    %v2504 = vpop.f32.mrf.mxu0
    %2505 = vdwg.mxu0
    %2506 = vmatpush.bf16.msra.mxu0 %v2265
    %2507 = vmatpush.bf16.msra.mxu0 %v2261
    %2508 = vmatpush.bf16.msra.mxu0 %v2257
    %2509 = vmatpush.bf16.msra.mxu0 %v2253
    %2510 = vmatpush.bf16.msra.mxu0 %v2249
    %2511 = vmatpush.bf16.msra.mxu0 %v2245
    %2512 = vmatpush.bf16.msra.mxu0 %v2241
    %2513 = vmatpush.bf16.msra.mxu0 %v2237
    %2514 = vmatmul.bf16.gmra.mxu0 %v1648
    %v2515 = vpop.f32.mrf.mxu0
    %v2516 = vadd.f32 %v2503, %v2515
    %v2517 = vpop.f32.mrf.mxu0
    %2518 = vdwg.mxu0
    %2519 = vmatpush.bf16.msra.mxu0 %v2297
    %2520 = vmatpush.bf16.msra.mxu0 %v2293
    %2521 = vmatpush.bf16.msra.mxu0 %v2289
    %2522 = vmatpush.bf16.msra.mxu0 %v2285
    %2523 = vmatpush.bf16.msra.mxu0 %v2281
    %2524 = vmatpush.bf16.msra.mxu0 %v2277
    %2525 = vmatpush.bf16.msra.mxu0 %v2273
    %2526 = vmatpush.bf16.msra.mxu0 %v2269
    %2527 = vmatmul.bf16.gmra.mxu0 %v1649
    %v2528 = vpop.f32.mrf.mxu0
    %v2529 = vadd.f32 %v2516, %v2528
    %v2530 = vpop.f32.mrf.mxu0
    %2531 = vdwg.mxu0
    %2532 = vmatpush.bf16.msra.mxu0 %v2202
    %2533 = vmatpush.bf16.msra.mxu0 %v2198
    %2534 = vmatpush.bf16.msra.mxu0 %v2194
    %2535 = vmatpush.bf16.msra.mxu0 %v2190
    %2536 = vmatpush.bf16.msra.mxu0 %v2186
    %2537 = vmatpush.bf16.msra.mxu0 %v2182
    %2538 = vmatpush.bf16.msra.mxu0 %v2178
    %2539 = vmatpush.bf16.msra.mxu0 %v2174
    %2540 = vmatmul.bf16.gmra.mxu0 %v1646
    %v2541 = vpop.f32.mrf.mxu0
    %v2542 = vadd.f32 %v1782, %v2541
    %v2543 = vpop.f32.mrf.mxu0
    %2544 = vdwg.mxu0
    %2545 = vmatpush.bf16.msra.mxu0 %v2234
    %2546 = vmatpush.bf16.msra.mxu0 %v2230
    %2547 = vmatpush.bf16.msra.mxu0 %v2226
    %2548 = vmatpush.bf16.msra.mxu0 %v2222
    %2549 = vmatpush.bf16.msra.mxu0 %v2218
    %2550 = vmatpush.bf16.msra.mxu0 %v2214
    %2551 = vmatpush.bf16.msra.mxu0 %v2210
    %2552 = vmatpush.bf16.msra.mxu0 %v2206
    %2553 = vmatmul.bf16.gmra.mxu0 %v1647
    %v2554 = vpop.f32.mrf.mxu0
    %v2555 = vadd.f32 %v2542, %v2554
    %v2556 = vpop.f32.mrf.mxu0
    %2557 = vdwg.mxu0
    %2558 = vmatpush.bf16.msra.mxu0 %v2266
    %2559 = vmatpush.bf16.msra.mxu0 %v2262
    %2560 = vmatpush.bf16.msra.mxu0 %v2258
    %2561 = vmatpush.bf16.msra.mxu0 %v2254
    %2562 = vmatpush.bf16.msra.mxu0 %v2250
    %2563 = vmatpush.bf16.msra.mxu0 %v2246
    %2564 = vmatpush.bf16.msra.mxu0 %v2242
    %2565 = vmatpush.bf16.msra.mxu0 %v2238
    %2566 = vmatmul.bf16.gmra.mxu0 %v1648
    %v2567 = vpop.f32.mrf.mxu0
    %v2568 = vadd.f32 %v2555, %v2567
    %v2569 = vpop.f32.mrf.mxu0
    %2570 = vdwg.mxu0
    %2571 = vmatpush.bf16.msra.mxu0 %v2298
    %2572 = vmatpush.bf16.msra.mxu0 %v2294
    %2573 = vmatpush.bf16.msra.mxu0 %v2290
    %2574 = vmatpush.bf16.msra.mxu0 %v2286
    %2575 = vmatpush.bf16.msra.mxu0 %v2282
    %2576 = vmatpush.bf16.msra.mxu0 %v2278
    %2577 = vmatpush.bf16.msra.mxu0 %v2274
    %2578 = vmatpush.bf16.msra.mxu0 %v2270
    %2579 = vmatmul.bf16.gmra.mxu0 %v1649
    %v2580 = vpop.f32.mrf.mxu0
    %v2581 = vadd.f32 %v2568, %v2580
    %v2582 = vpop.f32.mrf.mxu0
    %2583 = vdwg.mxu0
    %2584 = vmatpush.bf16.msra.mxu0 %v2203
    %2585 = vmatpush.bf16.msra.mxu0 %v2199
    %2586 = vmatpush.bf16.msra.mxu0 %v2195
    %2587 = vmatpush.bf16.msra.mxu0 %v2191
    %2588 = vmatpush.bf16.msra.mxu0 %v2187
    %2589 = vmatpush.bf16.msra.mxu0 %v2183
    %2590 = vmatpush.bf16.msra.mxu0 %v2179
    %2591 = vmatpush.bf16.msra.mxu0 %v2175
    %2592 = vmatmul.bf16.gmra.mxu0 %v1646
    %v2593 = vpop.f32.mrf.mxu0
    %v2594 = vadd.f32 %v1783, %v2593
    %v2595 = vpop.f32.mrf.mxu0
    %2596 = vdwg.mxu0
    %2597 = vmatpush.bf16.msra.mxu0 %v2235
    %2598 = vmatpush.bf16.msra.mxu0 %v2231
    %2599 = vmatpush.bf16.msra.mxu0 %v2227
    %2600 = vmatpush.bf16.msra.mxu0 %v2223
    %2601 = vmatpush.bf16.msra.mxu0 %v2219
    %2602 = vmatpush.bf16.msra.mxu0 %v2215
    %2603 = vmatpush.bf16.msra.mxu0 %v2211
    %2604 = vmatpush.bf16.msra.mxu0 %v2207
    %2605 = vmatmul.bf16.gmra.mxu0 %v1647
    %v2606 = vpop.f32.mrf.mxu0
    %v2607 = vadd.f32 %v2594, %v2606
    %v2608 = vpop.f32.mrf.mxu0
    %2609 = vdwg.mxu0
    %2610 = vmatpush.bf16.msra.mxu0 %v2267
    %2611 = vmatpush.bf16.msra.mxu0 %v2263
    %2612 = vmatpush.bf16.msra.mxu0 %v2259
    %2613 = vmatpush.bf16.msra.mxu0 %v2255
    %2614 = vmatpush.bf16.msra.mxu0 %v2251
    %2615 = vmatpush.bf16.msra.mxu0 %v2247
    %2616 = vmatpush.bf16.msra.mxu0 %v2243
    %2617 = vmatpush.bf16.msra.mxu0 %v2239
    %2618 = vmatmul.bf16.gmra.mxu0 %v1648
    %v2619 = vpop.f32.mrf.mxu0
    %v2620 = vadd.f32 %v2607, %v2619
    %v2621 = vpop.f32.mrf.mxu0
    %2622 = vdwg.mxu0
    %2623 = vmatpush.bf16.msra.mxu0 %v2299
    %2624 = vmatpush.bf16.msra.mxu0 %v2295
    %2625 = vmatpush.bf16.msra.mxu0 %v2291
    %2626 = vmatpush.bf16.msra.mxu0 %v2287
    %2627 = vmatpush.bf16.msra.mxu0 %v2283
    %2628 = vmatpush.bf16.msra.mxu0 %v2279
    %2629 = vmatpush.bf16.msra.mxu0 %v2275
    %2630 = vmatpush.bf16.msra.mxu0 %v2271
    %2631 = vmatmul.bf16.gmra.mxu0 %v1649
    %v2632 = vpop.f32.mrf.mxu0
    %v2633 = vadd.f32 %v2620, %v2632
    %v2634 = vpop.f32.mrf.mxu0
    %2635 = vdwg.mxu0
    %v2636 = vmax.f32 %v2477, 0.0
    %v2637 = vmax.f32 %v2529, 0.0
    %v2638 = vmax.f32 %v2581, 0.0
    %v2639 = vmax.f32 %v2633, 0.0
    %v2640 = vpack.c.bf16 %v2636, %v2636
    %v2641 = vpack.c.bf16 %v2637, %v2637
    %v2642 = vpack.c.bf16 %v2638, %v2638
    %v2643 = vpack.c.bf16 %v2639, %v2639
    %v2644 = vld [vmem:[%s5] sm:$0xf]
    %v2645 = vld [vmem:[%s5 + $0x4] sm:$0xf]
    %v2646 = vld [vmem:[%s5 + $0x8] sm:$0xf]
    %v2647 = vld [vmem:[%s5 + $0xc] sm:$0xf]
    %v2648 = vld [vmem:[%s5 + $0x10] sm:$0xf]
    %v2649 = vld [vmem:[%s5 + $0x14] sm:$0xf]
    %v2650 = vld [vmem:[%s5 + $0x18] sm:$0xf]
    %v2651 = vld [vmem:[%s5 + $0x1c] sm:$0xf]
    %v2652 = vld [vmem:[%s5 + $0x20] sm:$0xf]
    %v2653 = vld [vmem:[%s5 + $0x24] sm:$0xf]
    %v2654 = vld [vmem:[%s5 + $0x28] sm:$0xf]
    %v2655 = vld [vmem:[%s5 + $0x2c] sm:$0xf]
    %v2656 = vld [vmem:[%s5 + $0x30] sm:$0xf]
    %v2657 = vld [vmem:[%s5 + $0x34] sm:$0xf]
    %v2658 = vld [vmem:[%s5 + $0x38] sm:$0xf]
    %v2659 = vld [vmem:[%s5 + $0x3c] sm:$0xf]
    %v2660 = vld [vmem:[%s5 + $0x40] sm:$0xf]
    %v2661 = vld [vmem:[%s5 + $0x44] sm:$0xf]
    %v2662 = vld [vmem:[%s5 + $0x48] sm:$0xf]
    %v2663 = vld [vmem:[%s5 + $0x4c] sm:$0xf]
    %v2664 = vld [vmem:[%s5 + $0x50] sm:$0xf]
    %v2665 = vld [vmem:[%s5 + $0x54] sm:$0xf]
    %v2666 = vld [vmem:[%s5 + $0x58] sm:$0xf]
    %v2667 = vld [vmem:[%s5 + $0x5c] sm:$0xf]
    %v2668 = vld [vmem:[%s5 + $0x60] sm:$0xf]
    %v2669 = vld [vmem:[%s5 + $0x64] sm:$0xf]
    %v2670 = vld [vmem:[%s5 + $0x68] sm:$0xf]
    %v2671 = vld [vmem:[%s5 + $0x6c] sm:$0xf]
    %v2672 = vld [vmem:[%s5 + $0x70] sm:$0xf]
    %v2673 = vld [vmem:[%s5 + $0x74] sm:$0xf]
    %v2674 = vld [vmem:[%s5 + $0x78] sm:$0xf]
    %v2675 = vld [vmem:[%s5 + $0x7c] sm:$0xf]
    %v2676 = vld [vmem:[%s5 + $0x80] sm:$0xf]
    %v2677 = vld [vmem:[%s5 + $0x84] sm:$0xf]
    %v2678 = vld [vmem:[%s5 + $0x88] sm:$0xf]
    %v2679 = vld [vmem:[%s5 + $0x8c] sm:$0xf]
    %v2680 = vld [vmem:[%s5 + $0x90] sm:$0xf]
    %v2681 = vld [vmem:[%s5 + $0x94] sm:$0xf]
    %v2682 = vld [vmem:[%s5 + $0x98] sm:$0xf]
    %v2683 = vld [vmem:[%s5 + $0x9c] sm:$0xf]
    %v2684 = vld [vmem:[%s5 + $0xa0] sm:$0xf]
    %v2685 = vld [vmem:[%s5 + $0xa4] sm:$0xf]
    %v2686 = vld [vmem:[%s5 + $0xa8] sm:$0xf]
    %v2687 = vld [vmem:[%s5 + $0xac] sm:$0xf]
    %v2688 = vld [vmem:[%s5 + $0xb0] sm:$0xf]
    %v2689 = vld [vmem:[%s5 + $0xb4] sm:$0xf]
    %v2690 = vld [vmem:[%s5 + $0xb8] sm:$0xf]
    %v2691 = vld [vmem:[%s5 + $0xbc] sm:$0xf]
    %v2692 = vld [vmem:[%s5 + $0xc0] sm:$0xf]
    %v2693 = vld [vmem:[%s5 + $0xc4] sm:$0xf]
    %v2694 = vld [vmem:[%s5 + $0xc8] sm:$0xf]
    %v2695 = vld [vmem:[%s5 + $0xcc] sm:$0xf]
    %v2696 = vld [vmem:[%s5 + $0xd0] sm:$0xf]
    %v2697 = vld [vmem:[%s5 + $0xd4] sm:$0xf]
    %v2698 = vld [vmem:[%s5 + $0xd8] sm:$0xf]
    %v2699 = vld [vmem:[%s5 + $0xdc] sm:$0xf]
    %v2700 = vld [vmem:[%s5 + $0xe0] sm:$0xf]
    %v2701 = vld [vmem:[%s5 + $0xe4] sm:$0xf]
    %v2702 = vld [vmem:[%s5 + $0xe8] sm:$0xf]
    %v2703 = vld [vmem:[%s5 + $0xec] sm:$0xf]
    %v2704 = vld [vmem:[%s5 + $0xf0] sm:$0xf]
    %v2705 = vld [vmem:[%s5 + $0xf4] sm:$0xf]
    %v2706 = vld [vmem:[%s5 + $0xf8] sm:$0xf]
    %v2707 = vld [vmem:[%s5 + $0xfc] sm:$0xf]
    %v2708 = vld [vmem:[%s6] sm:$0x1]
    %v2710 = vperm.slane %v2708, 0
    %v2776 = vunpack.c.l.b16 %v2644
    %v2777 = vunpack.c.l.b16 %v2645
    %v2778 = vunpack.c.l.b16 %v2646
    %v2779 = vunpack.c.l.b16 %v2647
    %v2780 = vunpack.c.l.b16 %v2648
    %v2781 = vunpack.c.l.b16 %v2649
    %v2782 = vunpack.c.l.b16 %v2650
    %v2783 = vunpack.c.l.b16 %v2651
    %v2784 = vunpack.c.l.b16 %v2652
    %v2785 = vunpack.c.l.b16 %v2653
    %v2786 = vunpack.c.l.b16 %v2654
    %v2787 = vunpack.c.l.b16 %v2655
    %v2788 = vunpack.c.l.b16 %v2656
    %v2789 = vunpack.c.l.b16 %v2657
    %v2790 = vunpack.c.l.b16 %v2658
    %v2791 = vunpack.c.l.b16 %v2659
    %v2792 = vunpack.c.l.b16 %v2660
    %v2793 = vunpack.c.l.b16 %v2661
    %v2794 = vunpack.c.l.b16 %v2662
    %v2795 = vunpack.c.l.b16 %v2663
    %v2796 = vunpack.c.l.b16 %v2664
    %v2797 = vunpack.c.l.b16 %v2665
    %v2798 = vunpack.c.l.b16 %v2666
    %v2799 = vunpack.c.l.b16 %v2667
    %v2800 = vunpack.c.l.b16 %v2668
    %v2801 = vunpack.c.l.b16 %v2669
    %v2802 = vunpack.c.l.b16 %v2670
    %v2803 = vunpack.c.l.b16 %v2671
    %v2804 = vunpack.c.l.b16 %v2672
    %v2805 = vunpack.c.l.b16 %v2673
    %v2806 = vunpack.c.l.b16 %v2674
    %v2807 = vunpack.c.l.b16 %v2675
    %v2808 = vunpack.c.l.b16 %v2676
    %v2809 = vunpack.c.l.b16 %v2677
    %v2810 = vunpack.c.l.b16 %v2678
    %v2811 = vunpack.c.l.b16 %v2679
    %v2812 = vunpack.c.l.b16 %v2680
    %v2813 = vunpack.c.l.b16 %v2681
    %v2814 = vunpack.c.l.b16 %v2682
    %v2815 = vunpack.c.l.b16 %v2683
    %v2816 = vunpack.c.l.b16 %v2684
    %v2817 = vunpack.c.l.b16 %v2685
    %v2818 = vunpack.c.l.b16 %v2686
    %v2819 = vunpack.c.l.b16 %v2687
    %v2820 = vunpack.c.l.b16 %v2688
    %v2821 = vunpack.c.l.b16 %v2689
    %v2822 = vunpack.c.l.b16 %v2690
    %v2823 = vunpack.c.l.b16 %v2691
    %v2824 = vunpack.c.l.b16 %v2692
    %v2825 = vunpack.c.l.b16 %v2693
    %v2826 = vunpack.c.l.b16 %v2694
    %v2827 = vunpack.c.l.b16 %v2695
    %v2828 = vunpack.c.l.b16 %v2696
    %v2829 = vunpack.c.l.b16 %v2697
    %v2830 = vunpack.c.l.b16 %v2698
    %v2831 = vunpack.c.l.b16 %v2699
    %v2832 = vunpack.c.l.b16 %v2700
    %v2833 = vunpack.c.l.b16 %v2701
    %v2834 = vunpack.c.l.b16 %v2702
    %v2835 = vunpack.c.l.b16 %v2703
    %v2836 = vunpack.c.l.b16 %v2704
    %v2837 = vunpack.c.l.b16 %v2705
    %v2838 = vunpack.c.l.b16 %v2706
    %v2839 = vunpack.c.l.b16 %v2707
    %v2840 = vpack.c.b16 %v2777, %v2776
    %v2841 = vpack.c.b16 %v2779, %v2778
    %v2842 = vpack.c.b16 %v2781, %v2780
    %v2843 = vpack.c.b16 %v2783, %v2782
    %v2844 = vpack.c.b16 %v2785, %v2784
    %v2845 = vpack.c.b16 %v2787, %v2786
    %v2846 = vpack.c.b16 %v2789, %v2788
    %v2847 = vpack.c.b16 %v2791, %v2790
    %v2848 = vpack.c.b16 %v2793, %v2792
    %v2849 = vpack.c.b16 %v2795, %v2794
    %v2850 = vpack.c.b16 %v2797, %v2796
    %v2851 = vpack.c.b16 %v2799, %v2798
    %v2852 = vpack.c.b16 %v2801, %v2800
    %v2853 = vpack.c.b16 %v2803, %v2802
    %v2854 = vpack.c.b16 %v2805, %v2804
    %v2855 = vpack.c.b16 %v2807, %v2806
    %v2856 = vpack.c.b16 %v2809, %v2808
    %v2857 = vpack.c.b16 %v2811, %v2810
    %v2858 = vpack.c.b16 %v2813, %v2812
    %v2859 = vpack.c.b16 %v2815, %v2814
    %v2860 = vpack.c.b16 %v2817, %v2816
    %v2861 = vpack.c.b16 %v2819, %v2818
    %v2862 = vpack.c.b16 %v2821, %v2820
    %v2863 = vpack.c.b16 %v2823, %v2822
    %v2864 = vpack.c.b16 %v2825, %v2824
    %v2865 = vpack.c.b16 %v2827, %v2826
    %v2866 = vpack.c.b16 %v2829, %v2828
    %v2867 = vpack.c.b16 %v2831, %v2830
    %v2868 = vpack.c.b16 %v2833, %v2832
    %v2869 = vpack.c.b16 %v2835, %v2834
    %v2870 = vpack.c.b16 %v2837, %v2836
    %v2871 = vpack.c.b16 %v2839, %v2838
    %2904 = vmatpush.bf16.msra.mxu0 %v2847
    %2905 = vmatpush.bf16.msra.mxu0 %v2846
    %2906 = vmatpush.bf16.msra.mxu0 %v2845
    %2907 = vmatpush.bf16.msra.mxu0 %v2844
    %2908 = vmatpush.bf16.msra.mxu0 %v2843
    %2909 = vmatpush.bf16.msra.mxu0 %v2842
    %2910 = vmatpush.bf16.msra.mxu0 %v2841
    %2911 = vmatpush.bf16.msra.mxu0 %v2840
    %2912 = vmatmul.bf16.gmra.mxu0 %v2640
    %v2913 = vpop.f32.mrf.mxu0
    %v2914 = vadd.f32 %v2710, %v2913
    %v2915 = vpop.f32.mrf.mxu0
    %2916 = vdwg.mxu0
    %2917 = vmatpush.bf16.msra.mxu0 %v2855
    %2918 = vmatpush.bf16.msra.mxu0 %v2854
    %2919 = vmatpush.bf16.msra.mxu0 %v2853
    %2920 = vmatpush.bf16.msra.mxu0 %v2852
    %2921 = vmatpush.bf16.msra.mxu0 %v2851
    %2922 = vmatpush.bf16.msra.mxu0 %v2850
    %2923 = vmatpush.bf16.msra.mxu0 %v2849
    %2924 = vmatpush.bf16.msra.mxu0 %v2848
    %2925 = vmatmul.bf16.gmra.mxu0 %v2641
    %v2926 = vpop.f32.mrf.mxu0
    %v2927 = vadd.f32 %v2914, %v2926
    %v2928 = vpop.f32.mrf.mxu0
    %2929 = vdwg.mxu0
    %2930 = vmatpush.bf16.msra.mxu0 %v2863
    %2931 = vmatpush.bf16.msra.mxu0 %v2862
    %2932 = vmatpush.bf16.msra.mxu0 %v2861
    %2933 = vmatpush.bf16.msra.mxu0 %v2860
    %2934 = vmatpush.bf16.msra.mxu0 %v2859
    %2935 = vmatpush.bf16.msra.mxu0 %v2858
    %2936 = vmatpush.bf16.msra.mxu0 %v2857
    %2937 = vmatpush.bf16.msra.mxu0 %v2856
    %2938 = vmatmul.bf16.gmra.mxu0 %v2642
    %v2939 = vpop.f32.mrf.mxu0
    %v2940 = vadd.f32 %v2927, %v2939
    %v2941 = vpop.f32.mrf.mxu0
    %2942 = vdwg.mxu0
    %2943 = vmatpush.bf16.msra.mxu0 %v2871
    %2944 = vmatpush.bf16.msra.mxu0 %v2870
    %2945 = vmatpush.bf16.msra.mxu0 %v2869
    %2946 = vmatpush.bf16.msra.mxu0 %v2868
    %2947 = vmatpush.bf16.msra.mxu0 %v2867
    %2948 = vmatpush.bf16.msra.mxu0 %v2866
    %2949 = vmatpush.bf16.msra.mxu0 %v2865
    %2950 = vmatpush.bf16.msra.mxu0 %v2864
    %2951 = vmatmul.bf16.gmra.mxu0 %v2643
    %v2952 = vpop.f32.mrf.mxu0
    %v2953 = vadd.f32 %v2940, %v2952
    %v2954 = vpop.f32.mrf.mxu0
    %2955 = vdwg.mxu0
    %2956 = vmax.xlane.f32.xlu0 %v2953
    %v2957 = vpop.xlane.xlu0 %2956
    %v2958 = vsub.f32 %v2953, %v2957
    %v2959 = vmul.f32 %v2958, 1.442695
    %v2960 = vpow.pop %v2959
    %2961 = vadd.xlane.f32.xlu0 %v2960
    %v2962 = vpop.xlane.xlu0 %2961
    %v2963 = vrcp.pop %v2962
    %v2964 = vmul.f32 %v2962, %v2963
    %v2965 = vsub.f32 1.0, %v2964
    %v2966 = vmul.f32 %v2963, %v2965
    %v2967 = vadd.f32 %v2963, %v2966
    %vm2968 = vweird.f32 %v2962
    %vm2969 = vweird.f32 %v2963
    %vm2970 = vmor %vm2968, %vm2969
    %v2971 = vsel %vm2970, %v2963, %v2967
    %v2972 = vand.u32 2147483647, %v2962
    %vm2973 = vcmp.eq.f32.partialorder %v2972, 8.507059e+37
    %v2974 = vand.u32 %v2962, 2147483648
    %v2975 = vor.u32 1.1754944e-38, %v2974
    %v2976 = vsel %vm2973, %v2975, %v2971
    %v2977 = vmul.f32 %v2960, %v2976
    %2978 = vst [vmem:[#allocation7] sm:$0xff] %v2977
    // Predicated region
    $region38: #{mnist_net_forward.1} parent=1 // pred_check
      _
    $region39: #{mnist_net_forward.1} parent=1 // pred_check_branch
      %2980 = sbr.rel (0) target = $region41
    $region40: #{mnist_net_forward.1} parent=1 // pred_region
      %2982 = vsyncadd [#allocation4], 0
      %s2984 = sshll.u32 [#allocation7], 4
      %s2985 = int_to_ptr.vmem [resolvable:$true] %s2984
      %s2986 = sshll.u32 %s7, 4
      %s2987 = int_to_ptr.hbm [resolvable:$true] %s2986
      %2989 = dma.vmem_to_hbm [thread:$0]  %s2985, 128, %s2987, [#allocation4]
    $region41: #{mnist_net_forward.1} parent=1 // pred_fallthru
      _
    // Predicated region
    $region42: #{mnist_net_forward.1} parent=1 // pred_check
      _
    $region43: #{mnist_net_forward.1} parent=1 // pred_check_branch
      %2991 = sbr.rel (0) target = $region45
    $region44: #{mnist_net_forward.1} parent=1 // pred_region
      %2993 = dma.done [#allocation4], 128
    $region45: #{mnist_net_forward.1} parent=1 // pred_fallthru
      _
    %2994 = vsyncpa [#allocation3], 1
    %2995 = vsyncpa [#allocation6], 1
    %2996 = vsyncpa [#allocation4], 1

</llo_original>
